<compile_context>
chip_gen: v6e
topology: v6e:2x2x1
jax: 0.10.0
libtpu: 0.0.40
codegen_flags: <defaults>
</compile_context>

<pallas_src>
import jax
import jax.numpy as jnp
from jax.experimental import pallas as pl
from jax.experimental.pallas import tpu as pltpu


# ----------------------------- Pallas kernel ---------------------------------
def actor_rnn_kernel(
    x_ref,       # [B, D_in]      actor_input at timestep t (time dim squeezed)
    avail_ref,   # [B, AP]        avail mask at timestep t (lane-padded)
    h0_ref,      # [B, HP]        initial hidden state (lane-padded)
    w1_ref,      # [D_in, HP]     fc1 weight (x @ W layout, padded)
    wih_ref,     # [HP, 3*HP]     GRU input->gates weight, gates (r|z|n) concat
    whh_ref,     # [HP, 3*HP]     GRU hidden->gates weight, gates (r|z|n) concat
    w2_ref,      # [HP, AP]       fc2 weight
    b_ref,       # [4, 3*HP]      rows: b1 | b_ih | b_hh | b2 (lane-padded)
    prob_ref,    # out [B, AP]    softmax probs at timestep t
    hfin_ref,    # out [B, HP]    hidden state after the last step
    h_sc,        # scratch [B, HP] hidden-state carry (resident across grid)
):
    f32 = jnp.float32
    t = pl.program_id(0)
    HP = h_sc.shape[1]
    AP = prob_ref.shape[1]

    @pl.when(t == 0)
    def _():
        h_sc[...] = h0_ref[...]

    x = x_ref[...]
    h = h_sc[...]

    b1 = b_ref[0:1, 0:HP]
    b_ih = b_ref[1:2, :]
    b_hh = b_ref[2:3, :]
    b2 = b_ref[3:4, 0:AP]

    # ---- fc1 + ReLU ----
    x1 = jnp.dot(x, w1_ref[...], preferred_element_type=f32) + b1
    x1 = jnp.maximum(x1, 0.0)

    # ---- GRUCell: two fused gate matmuls, gate order (r, z, n) along lanes ----
    gi = jnp.dot(x1, wih_ref[...], preferred_element_type=f32) + b_ih   # [B, 3HP]
    gh = jnp.dot(h, whh_ref[...], preferred_element_type=f32) + b_hh    # [B, 3HP]

    r = jax.nn.sigmoid(gi[:, 0:HP] + gh[:, 0:HP])
    z = jax.nn.sigmoid(gi[:, HP:2 * HP] + gh[:, HP:2 * HP])
    n = jnp.tanh(gi[:, 2 * HP:3 * HP] + r * gh[:, 2 * HP:3 * HP])
    h_new = (1.0 - z) * n + z * h

    h_sc[...] = h_new
    hfin_ref[...] = h_new     # constant out-block index -> flushed once at end

    # ---- fc2 + avail mask + softmax ----
    logits = jnp.dot(h_new, w2_ref[...], preferred_element_type=f32) + b2
    logits = jnp.where(avail_ref[...] > 0.5, logits, -1e10)

    m = jnp.max(logits, axis=-1, keepdims=True)
    e = jnp.exp(logits - m)
    denom = jnp.sum(e, axis=-1, keepdims=True)
    prob_ref[...] = e * pl.reciprocal(denom, approx=False)


# ------------------------------- wrapper --------------------------------------
def actor_rnn_rollout(x_seq, avail_seq, h0, kp, *, hp=128, ap=128):
    """Run T GRU steps inside one pallas_call.

    x_seq:     [T, B, D_in] float32
    avail_seq: [T, B, A]    float32 0/1 mask
    h0:        [B, H]       float32
    kp:        fused/padded kernel params from fuse_and_pad()
    Returns (prob_seq [T, B, A], h_final [B, H]).
    """
    T, B, d_in = x_seq.shape
    A = avail_seq.shape[2]
    H = h0.shape[1]

    # Lane-dense padding (padded actions are masked off; padded hidden lanes
    # stay exactly zero through the recurrence by construction of the weights).
    avail_p = jnp.zeros((T, B, ap), jnp.float32).at[:, :, :A].set(avail_seq)
    h0_p = jnp.zeros((B, hp), jnp.float32).at[:, :H].set(h0)

    prob_p, h_fin_p = pl.pallas_call(
        actor_rnn_kernel,
        out_shape=(
            jax.ShapeDtypeStruct((T, B, ap), jnp.float32),
            jax.ShapeDtypeStruct((B, hp), jnp.float32),
        ),
        grid_spec=pltpu.PrefetchScalarGridSpec(
            num_scalar_prefetch=0,
            grid=(T,),
            in_specs=[
                pl.BlockSpec((None, B, d_in), lambda t: (t, 0, 0)),   # x_t
                pl.BlockSpec((None, B, ap), lambda t: (t, 0, 0)),     # avail_t
                pl.BlockSpec((B, hp), lambda t: (0, 0)),              # h0 (resident)
                pl.BlockSpec((d_in, hp), lambda t: (0, 0)),           # w1
                pl.BlockSpec((hp, 3 * hp), lambda t: (0, 0)),         # w_ih fused
                pl.BlockSpec((hp, 3 * hp), lambda t: (0, 0)),         # w_hh fused
                pl.BlockSpec((hp, ap), lambda t: (0, 0)),             # w2
                pl.BlockSpec((4, 3 * hp), lambda t: (0, 0)),          # packed biases
            ],
            out_specs=[
                pl.BlockSpec((None, B, ap), lambda t: (t, 0, 0)),     # prob_t
                pl.BlockSpec((B, hp), lambda t: (0, 0)),              # h_final
            ],
            scratch_shapes=[pltpu.VMEM((B, hp), jnp.float32)],
        ),
        compiler_params=pltpu.CompilerParams(
            dimension_semantics=("arbitrary",)),   # recurrence over time
    )(x_seq, avail_p, h0_p,
      kp["w1"], kp["w_ih"], kp["w_hh"], kp["w2"], kp["biases"])

    return prob_p[:, :, :A], h_fin_p[:, :H]


def actor_rnn_forward(x, avail, h, kp):
    """Single-step API matching the PyTorch Actor_RNN.forward semantics."""
    prob_seq, h_new = actor_rnn_rollout(x[None], avail[None], h, kp)
    return prob_seq[0], h_new


# ------------------------- deterministic parameters ----------------------------
def _orthogonal(key, shape, gain=1.0):
    # deterministic orthogonal init (mimics nn.init.orthogonal_)
    a = jax.random.normal(key, shape, dtype=jnp.float32)
    q, r = jnp.linalg.qr(a if shape[0] >= shape[1] else a.T)
    q = q * jnp.sign(jnp.diag(r))[None, :]
    if shape[0] < shape[1]:
        q = q.T
    return gain * q[: shape[0], : shape[1]]


def make_params(key, d_in, hidden, action_dim):
    """PyTorch-layout params of Actor_RNN with use_orthogonal_init=True."""
    ks = jax.random.split(key, 4)
    return dict(
        w1=_orthogonal(ks[0], (hidden, d_in)),                    # fc1.weight [H, D_in]
        b1=jnp.zeros((hidden,), jnp.float32),
        w_ih=_orthogonal(ks[1], (3 * hidden, hidden)),            # rnn.weight_ih [3H, H]
        w_hh=_orthogonal(ks[2], (3 * hidden, hidden)),            # rnn.weight_hh [3H, H]
        b_ih=jnp.zeros((3 * hidden,), jnp.float32),
        b_hh=jnp.zeros((3 * hidden,), jnp.float32),
        w2=_orthogonal(ks[3], (action_dim, hidden), gain=0.01),   # fc2.weight [A, H]
        b2=jnp.zeros((action_dim,), jnp.float32),
    )


def fuse_and_pad(p, *, hp=128, ap=128):
    """Transpose to x@W layout, fuse the three GRU gates, pad to 128 lanes."""
    H = p["w_hh"].shape[1]
    d_in = p["w1"].shape[1]
    A = p["w2"].shape[0]
    assert hp >= H and ap >= A and ap <= 3 * hp and hp <= 3 * hp

    w1 = jnp.zeros((d_in, hp), jnp.float32).at[:, :H].set(p["w1"].T)
    w2 = jnp.zeros((hp, ap), jnp.float32).at[:H, :A].set(p["w2"].T)

    def fuse_gates(w):            # w: [3H, H] torch layout -> [hp, 3*hp]
        out = jnp.zeros((hp, 3 * hp), jnp.float32)
        for g in range(3):
            out = out.at[:H, g * hp:g * hp + H].set(w[g * H:(g + 1) * H, :].T)
        return out

    def fuse_bias(b):             # [3H] -> [3*hp]
        out = jnp.zeros((3 * hp,), jnp.float32)
        for g in range(3):
            out = out.at[g * hp:g * hp + H].set(b[g * H:(g + 1) * H])
        return out

    biases = jnp.zeros((4, 3 * hp), jnp.float32)
    biases = biases.at[0, :H].set(p["b1"])
    biases = biases.at[1, :].set(fuse_bias(p["b_ih"]))
    biases = biases.at[2, :].set(fuse_bias(p["b_hh"]))
    biases = biases.at[3, :A].set(p["b2"])

    return dict(w1=w1, w_ih=fuse_gates(p["w_ih"]), w_hh=fuse_gates(p["w_hh"]),
                w2=w2, biases=biases)


# ------------------------------- reference -------------------------------------
def reference_rollout(x_seq, avail_seq, h0, p):
    H = h0.shape[1]

    def step(h, xa):
        x, avail = xa
        x1 = jnp.maximum(x @ p["w1"].T + p["b1"], 0.0)
        gi = x1 @ p["w_ih"].T + p["b_ih"]
        gh = h @ p["w_hh"].T + p["b_hh"]
        r = jax.nn.sigmoid(gi[:, :H] + gh[:, :H])
        z = jax.nn.sigmoid(gi[:, H:2 * H] + gh[:, H:2 * H])
        n = jnp.tanh(gi[:, 2 * H:] + r * gh[:, 2 * H:])
        h_new = (1.0 - z) * n + z * h
        logits = h_new @ p["w2"].T + p["b2"]
        logits = jnp.where(avail > 0.5, logits, -1e10)
        return h_new, jax.nn.softmax(logits, axis=-1)

    h_fin, probs = jax.lax.scan(step, h0, (x_seq, avail_seq))
    return probs, h_fin


# --------------------------------- main -----------------------------------------
if __name__ == "__main__":
    T = 4        # rollout length (handled by the in-kernel grid axis)
    B = 8        # batch / number of agents
    D_IN = 32    # actor_input_dim
    H = 32       # args.rnn_hidden_dim
    A = 16       # args.action_dim

    key = jax.random.PRNGKey(0)
    k_x, k_h, k_a, k_p = jax.random.split(key, 4)

    x_seq = jax.random.normal(k_x, (T, B, D_IN), dtype=jnp.float32)
    h0 = jax.random.normal(k_h, (B, H), dtype=jnp.float32)
    avail_seq = (jax.random.uniform(k_a, (T, B, A)) > 0.3).astype(jnp.float32)
    avail_seq = avail_seq.at[:, :, 0].set(1.0)  # >=1 available action per row

    params = make_params(k_p, D_IN, H, A)
    kparams = fuse_and_pad(params, hp=128, ap=128)

    prob_ref, h_fin_ref = reference_rollout(x_seq, avail_seq, h0, params)

    prob, h_fin = actor_rnn_rollout(x_seq, avail_seq, h0, kparams)
    jax.block_until_ready((prob, h_fin))

    assert prob.shape == (T, B, A) and h_fin.shape == (B, H)
    assert jnp.allclose(prob, prob_ref, atol=1e-5, rtol=1e-5)
    assert jnp.allclose(h_fin, h_fin_ref, atol=1e-5, rtol=1e-5)
    assert jnp.allclose(jnp.sum(prob, axis=-1), 1.0, atol=1e-5)
    assert jnp.all(jnp.where(avail_seq == 0.0, prob, 0.0) < 1e-6)

    # single-step call path (matches the PyTorch forward signature)
    prob1, h1 = actor_rnn_forward(x_seq[0], avail_seq[0], h0, kparams)
    jax.block_until_ready((prob1, h1))
    assert jnp.allclose(prob1, prob_ref[0], atol=1e-5, rtol=1e-5)

    print("KERNEL_OK")
</pallas_src>

<mosaic_0001>
module attributes {stable_mosaic.version = 11 : i64} {
  func.func @actor_rnn_kernel(%arg0: i32, %arg1: memref<1x8x32xf32, #tpu.memory_space<vmem>>, %arg2: memref<1x8x128xf32, #tpu.memory_space<vmem>>, %arg3: memref<8x128xf32, #tpu.memory_space<vmem>>, %arg4: memref<32x128xf32, #tpu.memory_space<vmem>>, %arg5: memref<128x384xf32, #tpu.memory_space<vmem>>, %arg6: memref<128x384xf32, #tpu.memory_space<vmem>>, %arg7: memref<128x128xf32, #tpu.memory_space<vmem>>, %arg8: memref<4x384xf32, #tpu.memory_space<vmem>>, %arg9: memref<1x8x128xf32, #tpu.memory_space<vmem>>, %arg10: memref<8x128xf32, #tpu.memory_space<vmem>>, %arg11: memref<8x128xf32, #tpu.memory_space<vmem>>) attributes {dimension_semantics = [#tpu.dimension_semantics<arbitrary>], iteration_bounds = array<i64: 4>, scalar_prefetch = 0 : i64, scratch_operands = 1 : i64, tpu.core_type = #tpu.core_type<tc>, window_params = [{transform_indices = @transform_0, window_bounds = array<i64: 1, 8, 32>}, {transform_indices = @transform_1, window_bounds = array<i64: 1, 8, 128>}, {pipeline_mode = #tpu.pipeline_mode<synchronous>, transform_indices = @transform_2, window_bounds = array<i64: 8, 128>}, {pipeline_mode = #tpu.pipeline_mode<synchronous>, transform_indices = @transform_3, window_bounds = array<i64: 32, 128>}, {pipeline_mode = #tpu.pipeline_mode<synchronous>, transform_indices = @transform_4, window_bounds = array<i64: 128, 384>}, {pipeline_mode = #tpu.pipeline_mode<synchronous>, transform_indices = @transform_5, window_bounds = array<i64: 128, 384>}, {pipeline_mode = #tpu.pipeline_mode<synchronous>, transform_indices = @transform_6, window_bounds = array<i64: 128, 128>}, {pipeline_mode = #tpu.pipeline_mode<synchronous>, transform_indices = @transform_7, window_bounds = array<i64: 4, 384>}, {transform_indices = @transform_8, window_bounds = array<i64: 1, 8, 128>}, {pipeline_mode = #tpu.pipeline_mode<synchronous>, transform_indices = @transform_9, window_bounds = array<i64: 8, 128>}]} {
    %c0_i32 = arith.constant 0 : i32
    %0 = arith.cmpi eq, %arg0, %c0_i32 : i32
    %1 = arith.extui %0 : i1 to i32
    %c0_i32_0 = arith.constant 0 : i32
    %2 = arith.cmpi ne, %1, %c0_i32_0 : i32
    scf.if %2 {
      %c0_39 = arith.constant 0 : index
      %c0_40 = arith.constant 0 : index
      %75 = vector.load %arg3[%c0_39, %c0_40] : memref<8x128xf32, #tpu.memory_space<vmem>>, vector<8x128xf32>
      %c0_41 = arith.constant 0 : index
      %c0_42 = arith.constant 0 : index
      %76 = vector.load %arg11[%c0_41, %c0_42] : memref<8x128xf32, #tpu.memory_space<vmem>>, vector<8x128xf32>
      tpu.vector_store %arg11[%c0_41, %c0_42], %75 {strides = array<i32>} : memref<8x128xf32, #tpu.memory_space<vmem>>, vector<8x128xf32>,
    } else {
    }
    %c0 = arith.constant 0 : index
    %c0_1 = arith.constant 0 : index
    %c0_2 = arith.constant 0 : index
    %3 = vector.load %arg1[%c0, %c0_1, %c0_2] : memref<1x8x32xf32, #tpu.memory_space<vmem>>, vector<1x8x32xf32>
    %4 = vector.shape_cast %3 : vector<1x8x32xf32> to vector<8x32xf32>
    %c0_3 = arith.constant 0 : index
    %c0_4 = arith.constant 0 : index
    %5 = vector.load %arg11[%c0_3, %c0_4] : memref<8x128xf32, #tpu.memory_space<vmem>>, vector<8x128xf32>
    %c0_5 = arith.constant 0 : index
    %c0_6 = arith.constant 0 : index
    %6 = vector.load %arg8[%c0_5, %c0_6] : memref<4x384xf32, #tpu.memory_space<vmem>>, vector<1x128xf32>
    %c1 = arith.constant 1 : index
    %c0_7 = arith.constant 0 : index
    %7 = vector.load %arg8[%c1, %c0_7] : memref<4x384xf32, #tpu.memory_space<vmem>>, vector<1x384xf32>
    %c2 = arith.constant 2 : index
    %c0_8 = arith.constant 0 : index
    %8 = vector.load %arg8[%c2, %c0_8] : memref<4x384xf32, #tpu.memory_space<vmem>>, vector<1x384xf32>
    %c3 = arith.constant 3 : index
    %c0_9 = arith.constant 0 : index
    %9 = vector.load %arg8[%c3, %c0_9] : memref<4x384xf32, #tpu.memory_space<vmem>>, vector<1x128xf32>
    %c0_10 = arith.constant 0 : index
    %c0_11 = arith.constant 0 : index
    %10 = vector.load %arg4[%c0_10, %c0_11] : memref<32x128xf32, #tpu.memory_space<vmem>>, vector<32x128xf32>
    %cst = arith.constant dense<0.000000e+00> : vector<8x128xf32>
    %11 = tpu.matmul %4, %10, %cst {dimension_numbers = #tpu.dot_dimension_numbers<[1], [0], [0], [1], [0, 0, 1, 1], [], []>} : vector<8x32xf32>, vector<32x128xf32>, vector<8x128xf32> -> vector<8x128xf32>
    %12 = vector.broadcast %6 : vector<1x128xf32> to vector<8x128xf32>
    %13 = arith.addf %11, %12 : vector<8x128xf32>
    %cst_12 = arith.constant 0.000000e+00 : f32
    %14 = vector.broadcast %cst_12 : f32 to vector<8x128xf32>
    %15 = arith.maximumf %13, %14 : vector<8x128xf32>
    %c0_13 = arith.constant 0 : index
    %c0_14 = arith.constant 0 : index
    %16 = vector.load %arg5[%c0_13, %c0_14] : memref<128x384xf32, #tpu.memory_space<vmem>>, vector<128x384xf32>
    %cst_15 = arith.constant dense<0.000000e+00> : vector<8x384xf32>
    %17 = tpu.matmul %15, %16, %cst_15 {dimension_numbers = #tpu.dot_dimension_numbers<[1], [0], [0], [1], [0, 0, 1, 1], [], []>} : vector<8x128xf32>, vector<128x384xf32>, vector<8x384xf32> -> vector<8x384xf32>
    %18 = vector.broadcast %7 : vector<1x384xf32> to vector<8x384xf32>
    %19 = arith.addf %17, %18 : vector<8x384xf32>
    %c0_16 = arith.constant 0 : index
    %c0_17 = arith.constant 0 : index
    %20 = vector.load %arg6[%c0_16, %c0_17] : memref<128x384xf32, #tpu.memory_space<vmem>>, vector<128x384xf32>
    %cst_18 = arith.constant dense<0.000000e+00> : vector<8x384xf32>
    %21 = tpu.matmul %5, %20, %cst_18 {dimension_numbers = #tpu.dot_dimension_numbers<[1], [0], [0], [1], [0, 0, 1, 1], [], []>} : vector<8x128xf32>, vector<128x384xf32>, vector<8x384xf32> -> vector<8x384xf32>
    %22 = vector.broadcast %8 : vector<1x384xf32> to vector<8x384xf32>
    %23 = arith.addf %21, %22 : vector<8x384xf32>
    %24 = vector.extract_strided_slice %19 {offsets = [0, 0], sizes = [8, 128], strides = [1, 1]} : vector<8x384xf32> to vector<8x128xf32>
    %25 = vector.extract_strided_slice %23 {offsets = [0, 0], sizes = [8, 128], strides = [1, 1]} : vector<8x384xf32> to vector<8x128xf32>
    %26 = arith.addf %24, %25 : vector<8x128xf32>
    %27 = arith.negf %26 : vector<8x128xf32>
    %28 = math.exp %27 : vector<8x128xf32>
    %cst_19 = arith.constant 1.000000e+00 : f32
    %29 = vector.broadcast %cst_19 : f32 to vector<8x128xf32>
    %30 = arith.addf %29, %28 : vector<8x128xf32>
    %31 = arith.divf %29, %30 : vector<8x128xf32>
    %32 = vector.extract_strided_slice %19 {offsets = [0, 128], sizes = [8, 128], strides = [1, 1]} : vector<8x384xf32> to vector<8x128xf32>
    %33 = vector.extract_strided_slice %23 {offsets = [0, 128], sizes = [8, 128], strides = [1, 1]} : vector<8x384xf32> to vector<8x128xf32>
    %34 = arith.addf %32, %33 : vector<8x128xf32>
    %35 = arith.negf %34 : vector<8x128xf32>
    %36 = math.exp %35 : vector<8x128xf32>
    %cst_20 = arith.constant 1.000000e+00 : f32
    %37 = vector.broadcast %cst_20 : f32 to vector<8x128xf32>
    %38 = arith.addf %37, %36 : vector<8x128xf32>
    %39 = arith.divf %37, %38 : vector<8x128xf32>
    %40 = vector.extract_strided_slice %19 {offsets = [0, 256], sizes = [8, 128], strides = [1, 1]} : vector<8x384xf32> to vector<8x128xf32>
    %41 = vector.extract_strided_slice %23 {offsets = [0, 256], sizes = [8, 128], strides = [1, 1]} : vector<8x384xf32> to vector<8x128xf32>
    %42 = arith.mulf %31, %41 : vector<8x128xf32>
    %43 = arith.addf %40, %42 : vector<8x128xf32>
    %44 = math.tanh %43 : vector<8x128xf32>
    %cst_21 = arith.constant 1.000000e+00 : f32
    %45 = vector.broadcast %cst_21 : f32 to vector<8x128xf32>
    %46 = arith.subf %45, %39 : vector<8x128xf32>
    %47 = arith.mulf %46, %44 : vector<8x128xf32>
    %48 = arith.mulf %39, %5 : vector<8x128xf32>
    %49 = arith.addf %47, %48 : vector<8x128xf32>
    %c0_22 = arith.constant 0 : index
    %c0_23 = arith.constant 0 : index
    %50 = vector.load %arg11[%c0_22, %c0_23] : memref<8x128xf32, #tpu.memory_space<vmem>>, vector<8x128xf32>
    tpu.vector_store %arg11[%c0_22, %c0_23], %49 {strides = array<i32>} : memref<8x128xf32, #tpu.memory_space<vmem>>, vector<8x128xf32>,
    %c0_24 = arith.constant 0 : index
    %c0_25 = arith.constant 0 : index
    %51 = vector.load %arg10[%c0_24, %c0_25] : memref<8x128xf32, #tpu.memory_space<vmem>>, vector<8x128xf32>
    tpu.vector_store %arg10[%c0_24, %c0_25], %49 {strides = array<i32>} : memref<8x128xf32, #tpu.memory_space<vmem>>, vector<8x128xf32>,
    %c0_26 = arith.constant 0 : index
    %c0_27 = arith.constant 0 : index
    %52 = vector.load %arg7[%c0_26, %c0_27] : memref<128x128xf32, #tpu.memory_space<vmem>>, vector<128x128xf32>
    %cst_28 = arith.constant dense<0.000000e+00> : vector<8x128xf32>
    %53 = tpu.matmul %49, %52, %cst_28 {dimension_numbers = #tpu.dot_dimension_numbers<[1], [0], [0], [1], [0, 0, 1, 1], [], []>} : vector<8x128xf32>, vector<128x128xf32>, vector<8x128xf32> -> vector<8x128xf32>
    %54 = vector.broadcast %9 : vector<1x128xf32> to vector<8x128xf32>
    %55 = arith.addf %53, %54 : vector<8x128xf32>
    %c0_29 = arith.constant 0 : index
    %c0_30 = arith.constant 0 : index
    %c0_31 = arith.constant 0 : index
    %56 = vector.load %arg2[%c0_29, %c0_30, %c0_31] : memref<1x8x128xf32, #tpu.memory_space<vmem>>, vector<1x8x128xf32>
    %57 = vector.shape_cast %56 : vector<1x8x128xf32> to vector<8x128xf32>
    %cst_32 = arith.constant 5.000000e-01 : f32
    %58 = vector.broadcast %cst_32 : f32 to vector<8x128xf32>
    %59 = arith.cmpf ogt, %57, %58 : vector<8x128xf32>
    %cst_33 = arith.constant -1.000000e+10 : f32
    %60 = vector.broadcast %cst_33 : f32 to vector<8x128xf32>
    %61 = arith.select %59, %55, %60 : vector<8x128xi1>, vector<8x128xf32>
    %cst_34 = arith.constant dense<0xFF800000> : vector<8xf32>
    %62 = vector.multi_reduction <maximumf>, %61, %cst_34 [1] : vector<8x128xf32> to vector<8xf32>
    %63 = vector.shape_cast %62 : vector<8xf32> to vector<8x1xf32>
    %64 = vector.broadcast %63 : vector<8x1xf32> to vector<8x128xf32>
    %65 = arith.subf %61, %64 : vector<8x128xf32>
    %66 = math.exp %65 : vector<8x128xf32>
    %cst_35 = arith.constant dense<0.000000e+00> : vector<8xf32>
    %67 = vector.multi_reduction <add>, %66, %cst_35 [1] : vector<8x128xf32> to vector<8xf32>
    %68 = vector.shape_cast %67 : vector<8xf32> to vector<8x1xf32>
    %69 = tpu.reciprocal %68 : vector<8x1xf32> -> vector<8x1xf32>
    %70 = vector.broadcast %69 : vector<8x1xf32> to vector<8x128xf32>
    %71 = arith.mulf %66, %70 : vector<8x128xf32>
    %c0_36 = arith.constant 0 : index
    %c0_37 = arith.constant 0 : index
    %c0_38 = arith.constant 0 : index
    %72 = vector.load %arg9[%c0_36, %c0_37, %c0_38] : memref<1x8x128xf32, #tpu.memory_space<vmem>>, vector<1x8x128xf32>
    %73 = vector.shape_cast %72 : vector<1x8x128xf32> to vector<8x128xf32>
    %74 = vector.shape_cast %71 : vector<8x128xf32> to vector<1x8x128xf32>
    tpu.vector_store %arg9[%c0_36, %c0_37, %c0_38], %74 {strides = array<i32>} : memref<1x8x128xf32, #tpu.memory_space<vmem>>, vector<1x8x128xf32>,
    return
  }
  func.func @transform_0(%arg0: i32) -> (i32, i32, i32) {
    %c0_i32 = arith.constant 0 : i32
    %c0_i32_0 = arith.constant 0 : i32
    %c0_i32_1 = arith.constant 0 : i32
    return %arg0, %c0_i32, %c0_i32_0 : i32, i32, i32
  }
  func.func @transform_1(%arg0: i32) -> (i32, i32, i32) {
    %c0_i32 = arith.constant 0 : i32
    %c0_i32_0 = arith.constant 0 : i32
    %c0_i32_1 = arith.constant 0 : i32
    return %arg0, %c0_i32, %c0_i32_0 : i32, i32, i32
  }
  func.func @transform_2(%arg0: i32) -> (i32, i32) {
    %c0_i32 = arith.constant 0 : i32
    %c0_i32_0 = arith.constant 0 : i32
    %c0_i32_1 = arith.constant 0 : i32
    return %c0_i32, %c0_i32_0 : i32, i32
  }
  func.func @transform_3(%arg0: i32) -> (i32, i32) {
    %c0_i32 = arith.constant 0 : i32
    %c0_i32_0 = arith.constant 0 : i32
    %c0_i32_1 = arith.constant 0 : i32
    return %c0_i32, %c0_i32_0 : i32, i32
  }
  func.func @transform_4(%arg0: i32) -> (i32, i32) {
    %c0_i32 = arith.constant 0 : i32
    %c0_i32_0 = arith.constant 0 : i32
    %c0_i32_1 = arith.constant 0 : i32
    return %c0_i32, %c0_i32_0 : i32, i32
  }
  func.func @transform_5(%arg0: i32) -> (i32, i32) {
    %c0_i32 = arith.constant 0 : i32
    %c0_i32_0 = arith.constant 0 : i32
    %c0_i32_1 = arith.constant 0 : i32
    return %c0_i32, %c0_i32_0 : i32, i32
  }
  func.func @transform_6(%arg0: i32) -> (i32, i32) {
    %c0_i32 = arith.constant 0 : i32
    %c0_i32_0 = arith.constant 0 : i32
    %c0_i32_1 = arith.constant 0 : i32
    return %c0_i32, %c0_i32_0 : i32, i32
  }
  func.func @transform_7(%arg0: i32) -> (i32, i32) {
    %c0_i32 = arith.constant 0 : i32
    %c0_i32_0 = arith.constant 0 : i32
    %c0_i32_1 = arith.constant 0 : i32
    return %c0_i32, %c0_i32_0 : i32, i32
  }
  func.func @transform_8(%arg0: i32) -> (i32, i32, i32) {
    %c0_i32 = arith.constant 0 : i32
    %c0_i32_0 = arith.constant 0 : i32
    %c0_i32_1 = arith.constant 0 : i32
    return %arg0, %c0_i32, %c0_i32_0 : i32, i32, i32
  }
  func.func @transform_9(%arg0: i32) -> (i32, i32) {
    %c0_i32 = arith.constant 0 : i32
    %c0_i32_0 = arith.constant 0 : i32
    %c0_i32_1 = arith.constant 0 : i32
    return %c0_i32, %c0_i32_0 : i32, i32
  }
}

</mosaic_0001>

<llo_original>
// kernel: tpu_custom_call.1
$region0: #{tpu_custom_call.1}
  #allocation0 [shape = 'u32[]', space=smem, size = 0x4, offset = 0x4, fixed_abs, tag = 'smem constant byte address 0x4 - core index']
  #allocation1 [shape = 'u32[144,128]{1,0:T(1,128)}', space=vmem, size = 0x12000, scoped, tag = 'internal scratch']
  #allocation2 [shape = 'f32[8,128]{1,0:T(8,128)}', space=vmem, size = 0x1000, scoped, tag = 'scratch operand']
  %s0 = inlined_call_operand.hbm [shape: f32[4,8,32], index: 0, kind: input, shape index: {}]
  %s1 = inlined_call_operand.hbm [shape: f32[4,8,128], index: 1, kind: input, shape index: {}]
  %s2 = inlined_call_operand.hbm [shape: f32[8,128], index: 2, kind: input, shape index: {}]
  %s3 = inlined_call_operand.hbm [shape: f32[32,128], index: 3, kind: input, shape index: {}]
  %s4 = inlined_call_operand.hbm [shape: f32[128,384], index: 4, kind: input, shape index: {}]
  %s5 = inlined_call_operand.hbm [shape: f32[128,384], index: 5, kind: input, shape index: {}]
  %s6 = inlined_call_operand.hbm [shape: f32[128,128], index: 6, kind: input, shape index: {}]
  %s7 = inlined_call_operand.vmem [shape: f32[4,384], index: 7, kind: input, shape index: {}]
  %s8 = inlined_call_operand.hbm [shape: f32[4,8,128], index: 8, kind: output, shape index: {0}]
  %s9 = inlined_call_operand.hbm [shape: f32[8,128], index: 9, kind: output, shape index: {1}]
  %10 = xla_tuple %s8, %s9
  %s11 = sld [smem:[#allocation0]]
  $region105: #{tpu_custom_call.1} parent=0
    _
  %s13 = ssub.s32 1, %s11
  %s14 = scalar_select 0, %s13, %s11
  $region1: #{tpu_custom_call.1} parent=0
    #allocation3 [shape = 'u8[8192]{0}', space=vmem, size = 0x2000, scoped, tag = 'input window, operand 0']
    #allocation4 [shape = 's32[2]{0}', space=sflag, size = 0x8, scoped, tag = 'scoped memory for tpu_custom_call.1']
    #allocation5 [shape = 's32[2]{0}', space=sflag, size = 0x8, scoped, tag = 'scoped memory for tpu_custom_call.1']
    #allocation6 [shape = 'u8[8192]{0}', space=vmem, size = 0x2000, scoped, tag = 'input window, operand 1']
    #allocation7 [shape = 's32[2]{0}', space=sflag, size = 0x8, scoped, tag = 'scoped memory for tpu_custom_call.1']
    #allocation8 [shape = 'u8[4096]{0}', space=vmem, size = 0x1000, scoped, tag = 'input window, operand 2, single buffered']
    #allocation9 [shape = 'u8[16384]{0}', space=vmem, size = 0x4000, scoped, tag = 'input window, operand 3, single buffered']
    #allocation10 [shape = 's32[1]{0}', space=sflag, size = 0x4, scoped, tag = 'scoped memory for tpu_custom_call.1']
    #allocation11 [shape = 'u8[196608]{0}', space=vmem, size = 0x30000, scoped, tag = 'input window, operand 4, single buffered']
    #allocation12 [shape = 'u8[196608]{0}', space=vmem, size = 0x30000, scoped, tag = 'input window, operand 5, single buffered']
    #allocation13 [shape = 's32[1]{0}', space=sflag, size = 0x4, scoped, tag = 'scoped memory for tpu_custom_call.1']
    #allocation14 [shape = 'u8[65536]{0}', space=vmem, size = 0x10000, scoped, tag = 'input window, operand 6, single buffered']
    #allocation15 [shape = 'u8[8192]{0}', space=vmem, size = 0x2000, scoped, tag = 'output window, operand 0']
    #allocation16 [shape = 'u8[4096]{0}', space=vmem, size = 0x1000, scoped, tag = 'output window, operand 1, single buffered']
    #allocation17 [shape = 's32[1]{0}', space=sflag, size = 0x4, scoped, tag = 'scoped memory for tpu_custom_call.1']
    %15 = vsyncpa [#allocation4], 0
    %s16 = scalar_lea.sflag [#allocation4], 1
    %17 = vsyncpa %s16, 0
    %18 = vsyncpa [#allocation7], 0
    %s19 = scalar_lea.sflag [#allocation7], 1
    %20 = vsyncpa %s19, 0
    %21 = vsyncpa [#allocation10], 0
    %22 = vsyncpa [#allocation13], 0
    %23 = vsyncpa [#allocation5], 0
    %s24 = scalar_lea.sflag [#allocation5], 1
    %25 = vsyncpa %s24, 0
    %26 = vsyncpa [#allocation17], 0
    loop: start=0, step=1, limit=6
    $region2: #{tpu_custom_call.1} parent=1 // loop_pre_header
      _
    $region3: #{tpu_custom_call.1} parent=1 // loop_header
      %s28 = sphi 0, %s32
      %p29 = scmp.ge.s32.totalorder %s28, 6
      %s38 = sphi 0, %s40
      %s41 = sphi 0, %s38
      %s42 = sphi 0, %s41
      %s58 = sphi 0, %s42
      %s64 = sphi 0, %s66
      %s67 = sphi 0, %s64
      %s68 = sphi 0, %s67
      %s84 = sphi 0, %s68
      %s88 = sphi 0, %s88
      %s90 = sphi 0, %s88
      %s91 = sphi 0, %s90
      %s105 = sphi 0, %s91
      %s109 = sphi 0, %s109
      %s111 = sphi 0, %s109
      %s112 = sphi 0, %s111
      %s126 = sphi 0, %s112
      %s130 = sphi 0, %s130
      %s132 = sphi 0, %s130
      %s133 = sphi 0, %s132
      %s147 = sphi 0, %s133
      %s151 = sphi 0, %s151
      %s153 = sphi 0, %s151
      %s154 = sphi 0, %s153
      %s168 = sphi 0, %s154
      %s172 = sphi 0, %s172
      %s174 = sphi 0, %s172
      %s175 = sphi 0, %s174
      %s189 = sphi 0, %s175
      %s193 = sphi 0, %s193
      %s195 = sphi 0, %s193
      %s196 = sphi 0, %s195
      %s210 = sphi 0, %s196
      %s216 = sphi 0, %s218
      %s219 = sphi 0, %s216
      %s220 = sphi 0, %s219
      %s236 = sphi 0, %s220
      %s240 = sphi 0, %s240
      %s242 = sphi 0, %s240
      %s243 = sphi 0, %s242
      %s257 = sphi 0, %s243
    $region4: #{tpu_custom_call.1} parent=1 // loop_header_branch
      %31 = sbr.rel (%p29) target = $region8
    $region5: #{tpu_custom_call.1} parent=1 // loop_body
      %s33 = ssub.s32 %s28, 1
      %s34 = ssub.s32 %s28, 2
      %s35 = sadd.s32 %s28, 1
      %s36 = ssub.s32 %s28, %s35
      %p37 = scmp.eq.s32.totalorder %s36, 0
      %s39 = sadd.s32 %s38, 1
      %s40 = scalar_select %p37, %s38, %s39
      %p43 = pneg %p37
      %p44 = scmp.eq.s32.totalorder %s28, 3
      %p45 = por %p43, %p44
      %p46 = scmp.ne.s32.totalorder %s38, %s41
      %p47 = scmp.eq.s32.totalorder %s28, 0
      %p48 = por %p46, %p47
      %p49 = scmp.ne.s32.totalorder %s38, %s41
      %p50 = scmp.eq.s32.totalorder %s33, 3
      %p51 = por %p49, %p50
      %p52 = scmp.ne.s32.totalorder %s41, %s42
      %p53 = scmp.eq.s32.totalorder %s33, 0
      %p54 = por %p52, %p53
      %p55 = scmp.ne.s32.totalorder %s41, %s42
      %p56 = scmp.eq.s32.totalorder %s34, 3
      %p57 = por %p55, %p56
      %p59 = scmp.ne.s32.totalorder %s42, %s58
      %p60 = scmp.eq.s32.totalorder %s34, 0
      %p61 = por %p59, %p60
      %s62 = ssub.s32 %s28, %s35
      %p63 = scmp.eq.s32.totalorder %s62, 0
      %s65 = sadd.s32 %s64, 1
      %s66 = scalar_select %p63, %s64, %s65
      %p69 = pneg %p63
      %p70 = scmp.eq.s32.totalorder %s28, 3
      %p71 = por %p69, %p70
      %p72 = scmp.ne.s32.totalorder %s64, %s67
      %p73 = scmp.eq.s32.totalorder %s28, 0
      %p74 = por %p72, %p73
      %p75 = scmp.ne.s32.totalorder %s64, %s67
      %p76 = scmp.eq.s32.totalorder %s33, 3
      %p77 = por %p75, %p76
      %p78 = scmp.ne.s32.totalorder %s67, %s68
      %p79 = scmp.eq.s32.totalorder %s33, 0
      %p80 = por %p78, %p79
      %p81 = scmp.ne.s32.totalorder %s67, %s68
      %p82 = scmp.eq.s32.totalorder %s34, 3
      %p83 = por %p81, %p82
      %p85 = scmp.ne.s32.totalorder %s68, %s84
      %p86 = scmp.eq.s32.totalorder %s34, 0
      %p87 = por %p85, %p86
      %s89 = sadd.s32 %s88, 1
      %p92 = scmp.eq.s32.totalorder %s28, 3
      %p93 = scmp.ne.s32.totalorder %s88, %s90
      %p94 = scmp.eq.s32.totalorder %s28, 0
      %p95 = por %p93, %p94
      %p96 = scmp.ne.s32.totalorder %s88, %s90
      %p97 = scmp.eq.s32.totalorder %s33, 3
      %p98 = por %p96, %p97
      %p99 = scmp.ne.s32.totalorder %s90, %s91
      %p100 = scmp.eq.s32.totalorder %s33, 0
      %p101 = por %p99, %p100
      %p102 = scmp.ne.s32.totalorder %s90, %s91
      %p103 = scmp.eq.s32.totalorder %s34, 3
      %p104 = por %p102, %p103
      %p106 = scmp.ne.s32.totalorder %s91, %s105
      %p107 = scmp.eq.s32.totalorder %s34, 0
      %p108 = por %p106, %p107
      %s110 = sadd.s32 %s109, 1
      %p113 = scmp.eq.s32.totalorder %s28, 3
      %p114 = scmp.ne.s32.totalorder %s109, %s111
      %p115 = scmp.eq.s32.totalorder %s28, 0
      %p116 = por %p114, %p115
      %p117 = scmp.ne.s32.totalorder %s109, %s111
      %p118 = scmp.eq.s32.totalorder %s33, 3
      %p119 = por %p117, %p118
      %p120 = scmp.ne.s32.totalorder %s111, %s112
      %p121 = scmp.eq.s32.totalorder %s33, 0
      %p122 = por %p120, %p121
      %p123 = scmp.ne.s32.totalorder %s111, %s112
      %p124 = scmp.eq.s32.totalorder %s34, 3
      %p125 = por %p123, %p124
      %p127 = scmp.ne.s32.totalorder %s112, %s126
      %p128 = scmp.eq.s32.totalorder %s34, 0
      %p129 = por %p127, %p128
      %s131 = sadd.s32 %s130, 1
      %p134 = scmp.eq.s32.totalorder %s28, 3
      %p135 = scmp.ne.s32.totalorder %s130, %s132
      %p136 = scmp.eq.s32.totalorder %s28, 0
      %p137 = por %p135, %p136
      %p138 = scmp.ne.s32.totalorder %s130, %s132
      %p139 = scmp.eq.s32.totalorder %s33, 3
      %p140 = por %p138, %p139
      %p141 = scmp.ne.s32.totalorder %s132, %s133
      %p142 = scmp.eq.s32.totalorder %s33, 0
      %p143 = por %p141, %p142
      %p144 = scmp.ne.s32.totalorder %s132, %s133
      %p145 = scmp.eq.s32.totalorder %s34, 3
      %p146 = por %p144, %p145
      %p148 = scmp.ne.s32.totalorder %s133, %s147
      %p149 = scmp.eq.s32.totalorder %s34, 0
      %p150 = por %p148, %p149
      %s152 = sadd.s32 %s151, 1
      %p155 = scmp.eq.s32.totalorder %s28, 3
      %p156 = scmp.ne.s32.totalorder %s151, %s153
      %p157 = scmp.eq.s32.totalorder %s28, 0
      %p158 = por %p156, %p157
      %p159 = scmp.ne.s32.totalorder %s151, %s153
      %p160 = scmp.eq.s32.totalorder %s33, 3
      %p161 = por %p159, %p160
      %p162 = scmp.ne.s32.totalorder %s153, %s154
      %p163 = scmp.eq.s32.totalorder %s33, 0
      %p164 = por %p162, %p163
      %p165 = scmp.ne.s32.totalorder %s153, %s154
      %p166 = scmp.eq.s32.totalorder %s34, 3
      %p167 = por %p165, %p166
      %p169 = scmp.ne.s32.totalorder %s154, %s168
      %p170 = scmp.eq.s32.totalorder %s34, 0
      %p171 = por %p169, %p170
      %s173 = sadd.s32 %s172, 1
      %p176 = scmp.eq.s32.totalorder %s28, 3
      %p177 = scmp.ne.s32.totalorder %s172, %s174
      %p178 = scmp.eq.s32.totalorder %s28, 0
      %p179 = por %p177, %p178
      %p180 = scmp.ne.s32.totalorder %s172, %s174
      %p181 = scmp.eq.s32.totalorder %s33, 3
      %p182 = por %p180, %p181
      %p183 = scmp.ne.s32.totalorder %s174, %s175
      %p184 = scmp.eq.s32.totalorder %s33, 0
      %p185 = por %p183, %p184
      %p186 = scmp.ne.s32.totalorder %s174, %s175
      %p187 = scmp.eq.s32.totalorder %s34, 3
      %p188 = por %p186, %p187
      %p190 = scmp.ne.s32.totalorder %s175, %s189
      %p191 = scmp.eq.s32.totalorder %s34, 0
      %p192 = por %p190, %p191
      %s194 = sadd.s32 %s193, 1
      %p197 = scmp.eq.s32.totalorder %s28, 3
      %p198 = scmp.ne.s32.totalorder %s193, %s195
      %p199 = scmp.eq.s32.totalorder %s28, 0
      %p200 = por %p198, %p199
      %p201 = scmp.ne.s32.totalorder %s193, %s195
      %p202 = scmp.eq.s32.totalorder %s33, 3
      %p203 = por %p201, %p202
      %p204 = scmp.ne.s32.totalorder %s195, %s196
      %p205 = scmp.eq.s32.totalorder %s33, 0
      %p206 = por %p204, %p205
      %p207 = scmp.ne.s32.totalorder %s195, %s196
      %p208 = scmp.eq.s32.totalorder %s34, 3
      %p209 = por %p207, %p208
      %p211 = scmp.ne.s32.totalorder %s196, %s210
      %p212 = scmp.eq.s32.totalorder %s34, 0
      %p213 = por %p211, %p212
      %s214 = ssub.s32 %s28, %s35
      %p215 = scmp.eq.s32.totalorder %s214, 0
      %s217 = sadd.s32 %s216, 1
      %s218 = scalar_select %p215, %s216, %s217
      %p221 = pneg %p215
      %p222 = scmp.eq.s32.totalorder %s28, 3
      %p223 = por %p221, %p222
      %p224 = scmp.ne.s32.totalorder %s216, %s219
      %p225 = scmp.eq.s32.totalorder %s28, 0
      %p226 = por %p224, %p225
      %p227 = scmp.ne.s32.totalorder %s216, %s219
      %p228 = scmp.eq.s32.totalorder %s33, 3
      %p229 = por %p227, %p228
      %p230 = scmp.ne.s32.totalorder %s219, %s220
      %p231 = scmp.eq.s32.totalorder %s33, 0
      %p232 = por %p230, %p231
      %p233 = scmp.ne.s32.totalorder %s219, %s220
      %p234 = scmp.eq.s32.totalorder %s34, 3
      %p235 = por %p233, %p234
      %p237 = scmp.ne.s32.totalorder %s220, %s236
      %p238 = scmp.eq.s32.totalorder %s34, 0
      %p239 = por %p237, %p238
      %s241 = sadd.s32 %s240, 1
      %p244 = scmp.eq.s32.totalorder %s28, 3
      %p245 = scmp.ne.s32.totalorder %s240, %s242
      %p246 = scmp.eq.s32.totalorder %s28, 0
      %p247 = por %p245, %p246
      %p248 = scmp.ne.s32.totalorder %s240, %s242
      %p249 = scmp.eq.s32.totalorder %s33, 3
      %p250 = por %p248, %p249
      %p251 = scmp.ne.s32.totalorder %s242, %s243
      %p252 = scmp.eq.s32.totalorder %s33, 0
      %p253 = por %p251, %p252
      %p254 = scmp.ne.s32.totalorder %s242, %s243
      %p255 = scmp.eq.s32.totalorder %s34, 3
      %p256 = por %p254, %p255
      %p258 = scmp.ne.s32.totalorder %s243, %s257
      %p259 = scmp.eq.s32.totalorder %s34, 0
      %p260 = por %p258, %p259
      %p261 = scmp.le.s32.totalorder 1, %s28
      %p262 = scmp.lt.s32.totalorder %s28, 5
      %p263 = pnand %p261, %p262
      %p264 = pneg %p263
      // Predicated region
      $region9: #{tpu_custom_call.1} parent=5 // pred_check
        _
      $region10: #{tpu_custom_call.1} parent=5 // pred_check_branch
        %266 = sbr.rel (%p263) target = $region12
      $region11: #{tpu_custom_call.1} parent=5 // pred_region
        %s267 = ssub.s32 %s28, 1
        // Predicated region
        $region13: #{tpu_custom_call.1} parent=11 // pred_check
          %p268 = pneg %p101
        $region14: #{tpu_custom_call.1} parent=11 // pred_check_branch
          %270 = sbr.rel (%p268) target = $region16
        $region15: #{tpu_custom_call.1} parent=11 // pred_region
          %s272 = ssub.s32 128, 128
          %273 = vsyncadd [#allocation7], %s272
          %s275 = sshll.u32 [#allocation8], 4
          %s276 = int_to_ptr.vmem [resolvable:$true] %s275
          %278 = dma.hbm_to_vmem [thread:$0]  %s2, 128, %s276, [#allocation7]
        $region16: #{tpu_custom_call.1} parent=11 // pred_fallthru
          _
        // Predicated region
        $region17: #{tpu_custom_call.1} parent=11 // pred_check
          %p279 = pneg %p122
        $region18: #{tpu_custom_call.1} parent=11 // pred_check_branch
          %281 = sbr.rel (%p279) target = $region20
        $region19: #{tpu_custom_call.1} parent=11 // pred_region
          %s283 = ssub.s32 512, 512
          %284 = vsyncadd [#allocation10], %s283
          %s285 = sshll.u32 [#allocation9], 4
          %s286 = int_to_ptr.vmem [resolvable:$true] %s285
          %291 = dma.hbm_to_vmem [thread:$0]  %s3, 512, %s286, [#allocation10], 128, 128, 8
        $region20: #{tpu_custom_call.1} parent=11 // pred_fallthru
          _
        // Predicated region
        $region21: #{tpu_custom_call.1} parent=11 // pred_check
          %p292 = pneg %p143
        $region22: #{tpu_custom_call.1} parent=11 // pred_check_branch
          %294 = sbr.rel (%p292) target = $region24
        $region23: #{tpu_custom_call.1} parent=11 // pred_region
          %s296 = ssub.s32 6144, 6144
          %297 = vsyncadd [#allocation10], %s296
          %s298 = sshll.u32 [#allocation11], 4
          %s299 = int_to_ptr.vmem [resolvable:$true] %s298
          %304 = dma.hbm_to_vmem [thread:$0]  %s4, 6144, %s299, [#allocation10], 384, 384, 24
        $region24: #{tpu_custom_call.1} parent=11 // pred_fallthru
          _
        // Predicated region
        $region25: #{tpu_custom_call.1} parent=11 // pred_check
          %p305 = pneg %p164
        $region26: #{tpu_custom_call.1} parent=11 // pred_check_branch
          %307 = sbr.rel (%p305) target = $region28
        $region27: #{tpu_custom_call.1} parent=11 // pred_region
          %s309 = ssub.s32 6144, 6144
          %310 = vsyncadd [#allocation13], %s309
          %s311 = sshll.u32 [#allocation12], 4
          %s312 = int_to_ptr.vmem [resolvable:$true] %s311
          %317 = dma.hbm_to_vmem [thread:$0]  %s5, 6144, %s312, [#allocation13], 384, 384, 24
        $region28: #{tpu_custom_call.1} parent=11 // pred_fallthru
          _
        // Predicated region
        $region29: #{tpu_custom_call.1} parent=11 // pred_check
          %p318 = pneg %p185
        $region30: #{tpu_custom_call.1} parent=11 // pred_check_branch
          %320 = sbr.rel (%p318) target = $region32
        $region31: #{tpu_custom_call.1} parent=11 // pred_region
          %s322 = ssub.s32 2048, 2048
          %323 = vsyncadd [#allocation13], %s322
          %s324 = sshll.u32 [#allocation14], 4
          %s325 = int_to_ptr.vmem [resolvable:$true] %s324
          %330 = dma.hbm_to_vmem [thread:$0]  %s6, 2048, %s325, [#allocation13], 128, 128, 8
        $region32: #{tpu_custom_call.1} parent=11 // pred_fallthru
          _
        // Predicated region
        $region33: #{tpu_custom_call.1} parent=11 // pred_check
          %p331 = pneg %p206
        $region34: #{tpu_custom_call.1} parent=11 // pred_check_branch
          %333 = sbr.rel (%p331) target = $region36
        $region35: #{tpu_custom_call.1} parent=11 // pred_region
          _
        $region36: #{tpu_custom_call.1} parent=11 // pred_fallthru
          _
      $region12: #{tpu_custom_call.1} parent=5 // pred_fallthru
        _
      %p334 = scmp.lt.s32.totalorder %s28, 4
      // Predicated region
      $region37: #{tpu_custom_call.1} parent=5 // pred_check
        %p335 = pneg %p334
      $region38: #{tpu_custom_call.1} parent=5 // pred_check_branch
        %337 = sbr.rel (%p335) target = $region40
      $region39: #{tpu_custom_call.1} parent=5 // pred_region
        // Predicated region
        $region41: #{tpu_custom_call.1} parent=39 // pred_check
          %p338 = pneg %p48
        $region42: #{tpu_custom_call.1} parent=39 // pred_check_branch
          %340 = sbr.rel (%p338) target = $region44
        $region43: #{tpu_custom_call.1} parent=39 // pred_region
          %s341 = sand.u32 %s38, 1
          %s342 = scalar_lea.sflag [#allocation4], %s341
          %s343 = sand.u32 %s38, 1
          %s344 = smul.addr %s343, 8
          %s345 = scalar_lea.vmem [#allocation3], %s344
          %s347 = ssub.s32 128, 128
          %348 = vsyncadd %s342, %s347
          %s349 = smul.addr %s28, 128
          %s350 = scalar_lea.hbm %s0, %s349
          %s352 = sshll.u32 %s345, 4
          %s353 = int_to_ptr.vmem [resolvable:$true] %s352
          %355 = dma.hbm_to_vmem [thread:$0]  %s350, 128, %s353, %s342
        $region44: #{tpu_custom_call.1} parent=39 // pred_fallthru
          _
        // Predicated region
        $region45: #{tpu_custom_call.1} parent=39 // pred_check
          %p356 = pneg %p74
        $region46: #{tpu_custom_call.1} parent=39 // pred_check_branch
          %358 = sbr.rel (%p356) target = $region48
        $region47: #{tpu_custom_call.1} parent=39 // pred_region
          %s359 = sand.u32 %s28, 1
          %s360 = scalar_lea.sflag [#allocation7], %s359
          %s361 = sand.u32 %s64, 1
          %s362 = smul.addr %s361, 8
          %s363 = scalar_lea.vmem [#allocation6], %s362
          %s365 = ssub.s32 128, 128
          %366 = vsyncadd %s360, %s365
          %s367 = smul.addr %s28, 128
          %s368 = scalar_lea.hbm %s1, %s367
          %s370 = sshll.u32 %s363, 4
          %s371 = int_to_ptr.vmem [resolvable:$true] %s370
          %373 = dma.hbm_to_vmem [thread:$0]  %s368, 128, %s371, %s360
        $region48: #{tpu_custom_call.1} parent=39 // pred_fallthru
          _
      $region40: #{tpu_custom_call.1} parent=5 // pred_fallthru
        _
      %p374 = scmp.le.s32.totalorder 1, %s28
      %p375 = scmp.lt.s32.totalorder %s28, 5
      %p376 = pnand %p374, %p375
      %p377 = pneg %p376
      // Predicated region
      $region49: #{tpu_custom_call.1} parent=5 // pred_check
        _
      $region50: #{tpu_custom_call.1} parent=5 // pred_check_branch
        %379 = sbr.rel (%p376) target = $region52
      $region51: #{tpu_custom_call.1} parent=5 // pred_region
        %s380 = ssub.s32 %s28, 1
        %s381 = sand.u32 %s41, 1
        %s382 = scalar_lea.sflag [#allocation4], %s381
        %s383 = sand.u32 %s41, 1
        %s384 = smul.addr %s383, 8
        %s385 = scalar_lea.vmem [#allocation3], %s384
        // Predicated region
        $region53: #{tpu_custom_call.1} parent=51 // pred_check
          %p386 = pneg %p54
        $region54: #{tpu_custom_call.1} parent=51 // pred_check_branch
          %388 = sbr.rel (%p386) target = $region56
        $region55: #{tpu_custom_call.1} parent=51 // pred_region
          %389 = dma.done %s382, 128
        $region56: #{tpu_custom_call.1} parent=51 // pred_fallthru
          _
        %s390 = sand.u32 %s33, 1
        %s391 = scalar_lea.sflag [#allocation7], %s390
        %s392 = sand.u32 %s67, 1
        %s393 = smul.addr %s392, 8
        %s394 = scalar_lea.vmem [#allocation6], %s393
        // Predicated region
        $region57: #{tpu_custom_call.1} parent=51 // pred_check
          %p395 = pneg %p80
        $region58: #{tpu_custom_call.1} parent=51 // pred_check_branch
          %397 = sbr.rel (%p395) target = $region60
        $region59: #{tpu_custom_call.1} parent=51 // pred_region
          %398 = dma.done %s391, 128
        $region60: #{tpu_custom_call.1} parent=51 // pred_fallthru
          _
        // Predicated region
        $region61: #{tpu_custom_call.1} parent=51 // pred_check
          %p399 = pneg %p101
        $region62: #{tpu_custom_call.1} parent=51 // pred_check_branch
          %401 = sbr.rel (%p399) target = $region64
        $region63: #{tpu_custom_call.1} parent=51 // pred_region
          %402 = dma.done [#allocation7], 128
        $region64: #{tpu_custom_call.1} parent=51 // pred_fallthru
          _
        // Predicated region
        $region65: #{tpu_custom_call.1} parent=51 // pred_check
          %p403 = pneg %p122
        $region66: #{tpu_custom_call.1} parent=51 // pred_check_branch
          %405 = sbr.rel (%p403) target = $region68
        $region67: #{tpu_custom_call.1} parent=51 // pred_region
          %406 = dma.done [#allocation10], 512
        $region68: #{tpu_custom_call.1} parent=51 // pred_fallthru
          _
        // Predicated region
        $region69: #{tpu_custom_call.1} parent=51 // pred_check
          %p407 = pneg %p143
        $region70: #{tpu_custom_call.1} parent=51 // pred_check_branch
          %409 = sbr.rel (%p407) target = $region72
        $region71: #{tpu_custom_call.1} parent=51 // pred_region
          %410 = dma.done [#allocation10], 6144
        $region72: #{tpu_custom_call.1} parent=51 // pred_fallthru
          _
        // Predicated region
        $region73: #{tpu_custom_call.1} parent=51 // pred_check
          %p411 = pneg %p164
        $region74: #{tpu_custom_call.1} parent=51 // pred_check_branch
          %413 = sbr.rel (%p411) target = $region76
        $region75: #{tpu_custom_call.1} parent=51 // pred_region
          %414 = dma.done [#allocation13], 6144
        $region76: #{tpu_custom_call.1} parent=51 // pred_fallthru
          _
        // Predicated region
        $region77: #{tpu_custom_call.1} parent=51 // pred_check
          %p415 = pneg %p185
        $region78: #{tpu_custom_call.1} parent=51 // pred_check_branch
          %417 = sbr.rel (%p415) target = $region80
        $region79: #{tpu_custom_call.1} parent=51 // pred_region
          %418 = dma.done [#allocation13], 2048
        $region80: #{tpu_custom_call.1} parent=51 // pred_fallthru
          _
        %s419 = sand.u32 %s41, 1
        %s420 = scalar_lea.sflag [#allocation4], %s419
        %s421 = sand.u32 %s41, 1
        %s422 = smul.addr %s421, 8
        %s423 = scalar_lea.vmem [#allocation3], %s422
        %p424 = pneg %p54
        %p425 = pneg %p51
        %s426 = sand.u32 %s33, 1
        %s427 = scalar_lea.sflag [#allocation7], %s426
        %s428 = sand.u32 %s67, 1
        %s429 = smul.addr %s428, 8
        %s430 = scalar_lea.vmem [#allocation6], %s429
        %p431 = pneg %p80
        %p432 = pneg %p77
        %p433 = pneg %p101
        %p434 = pneg %p98
        %p435 = pneg %p122
        %p436 = pneg %p119
        %p437 = pneg %p143
        %p438 = pneg %p140
        %p439 = pneg %p164
        %p440 = pneg %p161
        %p441 = pneg %p185
        %p442 = pneg %p182
        %p443 = pneg %p206
        %p444 = pneg %p203
        %p445 = pneg %p232
        %p446 = pneg %p229
        %s447 = sand.u32 %s219, 1
        %s448 = scalar_lea.sflag [#allocation5], %s447
        %s449 = sand.u32 %s219, 1
        %s450 = smul.addr %s449, 8
        %s451 = scalar_lea.vmem [#allocation15], %s450
        %p452 = pneg %p253
        %p453 = pneg %p250
        %p454 = scmp.eq.s32.totalorder %s33, 0
        // Predicated region
        $region81: #{tpu_custom_call.1} parent=51 // pred_check
          %p455 = pneg %p454
        $region82: #{tpu_custom_call.1} parent=51 // pred_check_branch
          %457 = sbr.rel (%p455) target = $region84
        $region83: #{tpu_custom_call.1} parent=51 // pred_region
          %v458 = vld [vmem:[#allocation8] sm:$0xff]
          %459 = vst [vmem:[#allocation2] sm:$0xff] %v458
        $region84: #{tpu_custom_call.1} parent=51 // pred_fallthru
          _
        %v460 = vld [vmem:[%s385] sm:$0xff]
        %v461 = vld [vmem:[#allocation2] sm:$0xff]
        %v462 = vld [vmem:[%s7] sm:$0x1]
        %s463 = scalar_lea.vmem %s7, 1
        %v464 = vld [vmem:[%s463] ss:$4 sm:$0x7]
        %s465 = scalar_lea.vmem %s7, 2
        %v466 = vld [vmem:[%s465] ss:$4 sm:$0x7]
        %v467 = vld [vmem:[%s7 + $0x3] sm:$0x1]
        %v468 = vld [vmem:[#allocation9] sm:$0xff]
        %v469 = vld [vmem:[#allocation9 + $0x8] sm:$0xff]
        %v470 = vld [vmem:[#allocation9 + $0x10] sm:$0xff]
        %v471 = vld [vmem:[#allocation9 + $0x18] sm:$0xff]
        %v472 = vlaneseq
        %v473 = vshrl.u32 %v472, 7
        %v474 = vsub.s32 0, %v473
        %v475 = vrot.slane %v462, %v474
        %vm476 = vcmask 261120
        %v478 = vsel %vm476, %v460, 0
        %480 = vmatprep.subr.mxu0 0.0
        %481 = vmatpush1.msra.mxu0 0.0
        %482 = vmatprep.subr.mxu0 0.0
        %483 = vmatpush1.msra.mxu0 0.0
        %484 = vmatprep.subr.mxu0 0.0
        %485 = vmatpush1.msra.mxu0 0.0
        %486 = vmatprep.subr.mxu0 0.0
        %487 = vmatpush1.msra.mxu0 0.0
        %488 = vmatprep.subr.mxu0 0.0
        %489 = vmatpush1.msra.mxu0 0.0
        %490 = vmatprep.subr.mxu0 0.0
        %491 = vmatpush1.msra.mxu0 0.0
        %492 = vmatprep.subr.mxu0 0.0
        %493 = vmatpush1.msra.mxu0 0.0
        %494 = vmatprep.subr.mxu0 0.0
        %495 = vmatpush1.msra.mxu0 0.0
        %496 = vmatprep.subr.mxu0 0.0
        %497 = vmatpush1.msra.mxu0 0.0
        %498 = vmatprep.subr.mxu0 0.0
        %499 = vmatpush1.msra.mxu0 0.0
        %500 = vmatprep.subr.mxu0 0.0
        %501 = vmatpush1.msra.mxu0 0.0
        %502 = vmatprep.subr.mxu0 0.0
        %503 = vmatpush1.msra.mxu0 0.0
        %504 = vmatprep.subr.mxu0 0.0
        %505 = vmatpush1.msra.mxu0 %v471
        %506 = vmatprep.subr.mxu0 0.0
        %507 = vmatpush1.msra.mxu0 %v470
        %508 = vmatprep.subr.mxu0 0.0
        %509 = vmatpush1.msra.mxu0 %v469
        %510 = vmatprep.subr.mxu0 0.0
        %511 = vmatpush1.msra.mxu0 %v468
        %512 = vmatprep.subr.mxu0 0.0
        %513 = vmatpush2.msra.mxu0 0.0
        %514 = vmatprep.subr.mxu0 0.0
        %515 = vmatpush2.msra.mxu0 0.0
        %516 = vmatprep.subr.mxu0 0.0
        %517 = vmatpush2.msra.mxu0 0.0
        %518 = vmatprep.subr.mxu0 0.0
        %519 = vmatpush2.msra.mxu0 0.0
        %520 = vmatprep.subr.mxu0 0.0
        %521 = vmatpush2.msra.mxu0 0.0
        %522 = vmatprep.subr.mxu0 0.0
        %523 = vmatpush2.msra.mxu0 0.0
        %524 = vmatprep.subr.mxu0 0.0
        %525 = vmatpush2.msra.mxu0 0.0
        %526 = vmatprep.subr.mxu0 0.0
        %527 = vmatpush2.msra.mxu0 0.0
        %528 = vmatprep.subr.mxu0 0.0
        %529 = vmatpush2.msra.mxu0 0.0
        %530 = vmatprep.subr.mxu0 0.0
        %531 = vmatpush2.msra.mxu0 0.0
        %532 = vmatprep.subr.mxu0 0.0
        %533 = vmatpush2.msra.mxu0 0.0
        %534 = vmatprep.subr.mxu0 0.0
        %535 = vmatpush2.msra.mxu0 0.0
        %536 = vmatprep.subr.mxu0 0.0
        %537 = vmatpush2.msra.mxu0 0.0
        %538 = vmatprep.subr.mxu0 0.0
        %539 = vmatpush2.msra.mxu0 0.0
        %540 = vmatprep.subr.mxu0 0.0
        %541 = vmatpush2.msra.mxu0 0.0
        %542 = vmatprep.subr.mxu0 0.0
        %543 = vmatpush2.msra.mxu0 0.0
        %544 = vmatprep.mubr.f32.mxu0 0.0
        %545 = vmatmul.mubr.f32.gmra.mxu0 %v478
        %v546 = vpop.f32.mrf.mxu0
        %v547 = vadd.f32 %v475, %v546
        %v548 = vpop.f32.mrf.mxu0
        %549 = vdwg.mxu0
        %v550 = vmax.f32 %v547, 0.0
        %v551 = vld [vmem:[#allocation11] sm:$0xff]
        %v552 = vld [vmem:[#allocation11 + $0x8] sm:$0xff]
        %v553 = vld [vmem:[#allocation11 + $0x10] sm:$0xff]
        %v554 = vld [vmem:[#allocation11 + $0x18] sm:$0xff]
        %v555 = vld [vmem:[#allocation11 + $0x20] sm:$0xff]
        %v556 = vld [vmem:[#allocation11 + $0x28] sm:$0xff]
        %v557 = vld [vmem:[#allocation11 + $0x30] sm:$0xff]
        %v558 = vld [vmem:[#allocation11 + $0x38] sm:$0xff]
        %v559 = vld [vmem:[#allocation11 + $0x40] sm:$0xff]
        %v560 = vld [vmem:[#allocation11 + $0x48] sm:$0xff]
        %v561 = vld [vmem:[#allocation11 + $0x50] sm:$0xff]
        %v562 = vld [vmem:[#allocation11 + $0x58] sm:$0xff]
        %v563 = vld [vmem:[#allocation11 + $0x60] sm:$0xff]
        %v564 = vld [vmem:[#allocation11 + $0x68] sm:$0xff]
        %v565 = vld [vmem:[#allocation11 + $0x70] sm:$0xff]
        %v566 = vld [vmem:[#allocation11 + $0x78] sm:$0xff]
        %v567 = vld [vmem:[#allocation11 + $0x80] sm:$0xff]
        %v568 = vld [vmem:[#allocation11 + $0x88] sm:$0xff]
        %v569 = vld [vmem:[#allocation11 + $0x90] sm:$0xff]
        %v570 = vld [vmem:[#allocation11 + $0x98] sm:$0xff]
        %v571 = vld [vmem:[#allocation11 + $0xa0] sm:$0xff]
        %v572 = vld [vmem:[#allocation11 + $0xa8] sm:$0xff]
        %v573 = vld [vmem:[#allocation11 + $0xb0] sm:$0xff]
        %v574 = vld [vmem:[#allocation11 + $0xb8] sm:$0xff]
        %v575 = vld [vmem:[#allocation11 + $0xc0] sm:$0xff]
        %v576 = vld [vmem:[#allocation11 + $0xc8] sm:$0xff]
        %v577 = vld [vmem:[#allocation11 + $0xd0] sm:$0xff]
        %v578 = vld [vmem:[#allocation11 + $0xd8] sm:$0xff]
        %v579 = vld [vmem:[#allocation11 + $0xe0] sm:$0xff]
        %v580 = vld [vmem:[#allocation11 + $0xe8] sm:$0xff]
        %v581 = vld [vmem:[#allocation11 + $0xf0] sm:$0xff]
        %v582 = vld [vmem:[#allocation11 + $0xf8] sm:$0xff]
        %v583 = vld [vmem:[#allocation11 + $0x100] sm:$0xff]
        %v584 = vld [vmem:[#allocation11 + $0x108] sm:$0xff]
        %v585 = vld [vmem:[#allocation11 + $0x110] sm:$0xff]
        %v586 = vld [vmem:[#allocation11 + $0x118] sm:$0xff]
        %v587 = vld [vmem:[#allocation11 + $0x120] sm:$0xff]
        %v588 = vld [vmem:[#allocation11 + $0x128] sm:$0xff]
        %v589 = vld [vmem:[#allocation11 + $0x130] sm:$0xff]
        %v590 = vld [vmem:[#allocation11 + $0x138] sm:$0xff]
        %v591 = vld [vmem:[#allocation11 + $0x140] sm:$0xff]
        %v592 = vld [vmem:[#allocation11 + $0x148] sm:$0xff]
        %v593 = vld [vmem:[#allocation11 + $0x150] sm:$0xff]
        %v594 = vld [vmem:[#allocation11 + $0x158] sm:$0xff]
        %v595 = vld [vmem:[#allocation11 + $0x160] sm:$0xff]
        %v596 = vld [vmem:[#allocation11 + $0x168] sm:$0xff]
        %v597 = vld [vmem:[#allocation11 + $0x170] sm:$0xff]
        %v598 = vld [vmem:[#allocation11 + $0x178] sm:$0xff]
        %v600 = vlaneseq
        %v601 = vshrl.u32 %v600, 7
        %v602 = vsub.s32 0, %v601
        %v603 = vrot.slane %v464, %v602
        %v604 = vlaneseq
        %v605 = vshrl.u32 %v604, 7
        %v606 = vsub.s32 1, %v605
        %v607 = vrot.slane %v464, %v606
        %v608 = vlaneseq
        %v609 = vshrl.u32 %v608, 7
        %v610 = vsub.s32 2, %v609
        %v611 = vrot.slane %v464, %v610
        %615 = vmatprep.subr.mxu0 %v597
        %616 = vmatpush1.msra.mxu0 %v596
        %617 = vmatprep.subr.mxu0 %v594
        %618 = vmatpush1.msra.mxu0 %v593
        %619 = vmatprep.subr.mxu0 %v591
        %620 = vmatpush1.msra.mxu0 %v590
        %621 = vmatprep.subr.mxu0 %v588
        %622 = vmatpush1.msra.mxu0 %v587
        %623 = vmatprep.subr.mxu0 %v585
        %624 = vmatpush1.msra.mxu0 %v584
        %625 = vmatprep.subr.mxu0 %v582
        %626 = vmatpush1.msra.mxu0 %v581
        %627 = vmatprep.subr.mxu0 %v579
        %628 = vmatpush1.msra.mxu0 %v578
        %629 = vmatprep.subr.mxu0 %v576
        %630 = vmatpush1.msra.mxu0 %v575
        %631 = vmatprep.subr.mxu0 %v573
        %632 = vmatpush1.msra.mxu0 %v572
        %633 = vmatprep.subr.mxu0 %v570
        %634 = vmatpush1.msra.mxu0 %v569
        %635 = vmatprep.subr.mxu0 %v567
        %636 = vmatpush1.msra.mxu0 %v566
        %637 = vmatprep.subr.mxu0 %v564
        %638 = vmatpush1.msra.mxu0 %v563
        %639 = vmatprep.subr.mxu0 %v561
        %640 = vmatpush1.msra.mxu0 %v560
        %641 = vmatprep.subr.mxu0 %v558
        %642 = vmatpush1.msra.mxu0 %v557
        %643 = vmatprep.subr.mxu0 %v555
        %644 = vmatpush1.msra.mxu0 %v554
        %645 = vmatprep.subr.mxu0 %v552
        %646 = vmatpush1.msra.mxu0 %v551
        %647 = vmatprep.subr.mxu0 0.0
        %648 = vmatpush2.msra.mxu0 0.0
        %649 = vmatprep.subr.mxu0 0.0
        %650 = vmatpush2.msra.mxu0 0.0
        %651 = vmatprep.subr.mxu0 0.0
        %652 = vmatpush2.msra.mxu0 0.0
        %653 = vmatprep.subr.mxu0 0.0
        %654 = vmatpush2.msra.mxu0 0.0
        %655 = vmatprep.subr.mxu0 0.0
        %656 = vmatpush2.msra.mxu0 0.0
        %657 = vmatprep.subr.mxu0 0.0
        %658 = vmatpush2.msra.mxu0 0.0
        %659 = vmatprep.subr.mxu0 0.0
        %660 = vmatpush2.msra.mxu0 0.0
        %661 = vmatprep.subr.mxu0 0.0
        %662 = vmatpush2.msra.mxu0 0.0
        %663 = vmatprep.subr.mxu0 0.0
        %664 = vmatpush2.msra.mxu0 0.0
        %665 = vmatprep.subr.mxu0 0.0
        %666 = vmatpush2.msra.mxu0 0.0
        %667 = vmatprep.subr.mxu0 0.0
        %668 = vmatpush2.msra.mxu0 0.0
        %669 = vmatprep.subr.mxu0 0.0
        %670 = vmatpush2.msra.mxu0 0.0
        %671 = vmatprep.subr.mxu0 0.0
        %672 = vmatpush2.msra.mxu0 0.0
        %673 = vmatprep.subr.mxu0 0.0
        %674 = vmatpush2.msra.mxu0 0.0
        %675 = vmatprep.subr.mxu0 0.0
        %676 = vmatpush2.msra.mxu0 0.0
        %677 = vmatprep.subr.mxu0 0.0
        %678 = vmatpush2.msra.mxu0 0.0
        %679 = vmatprep.mubr.f32.mxu0 0.0
        %680 = vmatmul.mubr.f32.gmra.mxu0 %v550
        %v681 = vpop.f32.mrf.mxu0
        %v682 = vadd.f32 %v603, %v681
        %v683 = vpop.f32.mrf.mxu0
        %v684 = vadd.f32 %v607, %v683
        %685 = vdwg.mxu0
        %686 = vmatprep.subr.mxu0 0.0
        %687 = vmatpush1.msra.mxu0 %v598
        %688 = vmatprep.subr.mxu0 0.0
        %689 = vmatpush1.msra.mxu0 %v595
        %690 = vmatprep.subr.mxu0 0.0
        %691 = vmatpush1.msra.mxu0 %v592
        %692 = vmatprep.subr.mxu0 0.0
        %693 = vmatpush1.msra.mxu0 %v589
        %694 = vmatprep.subr.mxu0 0.0
        %695 = vmatpush1.msra.mxu0 %v586
        %696 = vmatprep.subr.mxu0 0.0
        %697 = vmatpush1.msra.mxu0 %v583
        %698 = vmatprep.subr.mxu0 0.0
        %699 = vmatpush1.msra.mxu0 %v580
        %700 = vmatprep.subr.mxu0 0.0
        %701 = vmatpush1.msra.mxu0 %v577
        %702 = vmatprep.subr.mxu0 0.0
        %703 = vmatpush1.msra.mxu0 %v574
        %704 = vmatprep.subr.mxu0 0.0
        %705 = vmatpush1.msra.mxu0 %v571
        %706 = vmatprep.subr.mxu0 0.0
        %707 = vmatpush1.msra.mxu0 %v568
        %708 = vmatprep.subr.mxu0 0.0
        %709 = vmatpush1.msra.mxu0 %v565
        %710 = vmatprep.subr.mxu0 0.0
        %711 = vmatpush1.msra.mxu0 %v562
        %712 = vmatprep.subr.mxu0 0.0
        %713 = vmatpush1.msra.mxu0 %v559
        %714 = vmatprep.subr.mxu0 0.0
        %715 = vmatpush1.msra.mxu0 %v556
        %716 = vmatprep.subr.mxu0 0.0
        %717 = vmatpush1.msra.mxu0 %v553
        %718 = vmatprep.subr.mxu0 0.0
        %719 = vmatpush2.msra.mxu0 0.0
        %720 = vmatprep.subr.mxu0 0.0
        %721 = vmatpush2.msra.mxu0 0.0
        %722 = vmatprep.subr.mxu0 0.0
        %723 = vmatpush2.msra.mxu0 0.0
        %724 = vmatprep.subr.mxu0 0.0
        %725 = vmatpush2.msra.mxu0 0.0
        %726 = vmatprep.subr.mxu0 0.0
        %727 = vmatpush2.msra.mxu0 0.0
        %728 = vmatprep.subr.mxu0 0.0
        %729 = vmatpush2.msra.mxu0 0.0
        %730 = vmatprep.subr.mxu0 0.0
        %731 = vmatpush2.msra.mxu0 0.0
        %732 = vmatprep.subr.mxu0 0.0
        %733 = vmatpush2.msra.mxu0 0.0
        %734 = vmatprep.subr.mxu0 0.0
        %735 = vmatpush2.msra.mxu0 0.0
        %736 = vmatprep.subr.mxu0 0.0
        %737 = vmatpush2.msra.mxu0 0.0
        %738 = vmatprep.subr.mxu0 0.0
        %739 = vmatpush2.msra.mxu0 0.0
        %740 = vmatprep.subr.mxu0 0.0
        %741 = vmatpush2.msra.mxu0 0.0
        %742 = vmatprep.subr.mxu0 0.0
        %743 = vmatpush2.msra.mxu0 0.0
        %744 = vmatprep.subr.mxu0 0.0
        %745 = vmatpush2.msra.mxu0 0.0
        %746 = vmatprep.subr.mxu0 0.0
        %747 = vmatpush2.msra.mxu0 0.0
        %748 = vmatprep.subr.mxu0 0.0
        %749 = vmatpush2.msra.mxu0 0.0
        %750 = vmatprep.mubr.f32.mxu0 0.0
        %751 = vmatmul.mubr.f32.gmra.mxu0 %v550
        %v752 = vpop.f32.mrf.mxu0
        %v753 = vadd.f32 %v611, %v752
        %v754 = vpop.f32.mrf.mxu0
        %755 = vdwg.mxu0
        %v756 = vld [vmem:[#allocation12] sm:$0xff]
        %v757 = vld [vmem:[#allocation12 + $0x8] sm:$0xff]
        %v758 = vld [vmem:[#allocation12 + $0x10] sm:$0xff]
        %v759 = vld [vmem:[#allocation12 + $0x18] sm:$0xff]
        %v760 = vld [vmem:[#allocation12 + $0x20] sm:$0xff]
        %v761 = vld [vmem:[#allocation12 + $0x28] sm:$0xff]
        %v762 = vld [vmem:[#allocation12 + $0x30] sm:$0xff]
        %v763 = vld [vmem:[#allocation12 + $0x38] sm:$0xff]
        %v764 = vld [vmem:[#allocation12 + $0x40] sm:$0xff]
        %v765 = vld [vmem:[#allocation12 + $0x48] sm:$0xff]
        %v766 = vld [vmem:[#allocation12 + $0x50] sm:$0xff]
        %v767 = vld [vmem:[#allocation12 + $0x58] sm:$0xff]
        %v768 = vld [vmem:[#allocation12 + $0x60] sm:$0xff]
        %v769 = vld [vmem:[#allocation12 + $0x68] sm:$0xff]
        %v770 = vld [vmem:[#allocation12 + $0x70] sm:$0xff]
        %v771 = vld [vmem:[#allocation12 + $0x78] sm:$0xff]
        %v772 = vld [vmem:[#allocation12 + $0x80] sm:$0xff]
        %v773 = vld [vmem:[#allocation12 + $0x88] sm:$0xff]
        %v774 = vld [vmem:[#allocation12 + $0x90] sm:$0xff]
        %v775 = vld [vmem:[#allocation12 + $0x98] sm:$0xff]
        %v776 = vld [vmem:[#allocation12 + $0xa0] sm:$0xff]
        %v777 = vld [vmem:[#allocation12 + $0xa8] sm:$0xff]
        %v778 = vld [vmem:[#allocation12 + $0xb0] sm:$0xff]
        %v779 = vld [vmem:[#allocation12 + $0xb8] sm:$0xff]
        %v780 = vld [vmem:[#allocation12 + $0xc0] sm:$0xff]
        %v781 = vld [vmem:[#allocation12 + $0xc8] sm:$0xff]
        %v782 = vld [vmem:[#allocation12 + $0xd0] sm:$0xff]
        %v783 = vld [vmem:[#allocation12 + $0xd8] sm:$0xff]
        %v784 = vld [vmem:[#allocation12 + $0xe0] sm:$0xff]
        %v785 = vld [vmem:[#allocation12 + $0xe8] sm:$0xff]
        %v786 = vld [vmem:[#allocation12 + $0xf0] sm:$0xff]
        %v787 = vld [vmem:[#allocation12 + $0xf8] sm:$0xff]
        %v788 = vld [vmem:[#allocation12 + $0x100] sm:$0xff]
        %v789 = vld [vmem:[#allocation12 + $0x108] sm:$0xff]
        %v790 = vld [vmem:[#allocation12 + $0x110] sm:$0xff]
        %v791 = vld [vmem:[#allocation12 + $0x118] sm:$0xff]
        %v792 = vld [vmem:[#allocation12 + $0x120] sm:$0xff]
        %v793 = vld [vmem:[#allocation12 + $0x128] sm:$0xff]
        %v794 = vld [vmem:[#allocation12 + $0x130] sm:$0xff]
        %v795 = vld [vmem:[#allocation12 + $0x138] sm:$0xff]
        %v796 = vld [vmem:[#allocation12 + $0x140] sm:$0xff]
        %v797 = vld [vmem:[#allocation12 + $0x148] sm:$0xff]
        %v798 = vld [vmem:[#allocation12 + $0x150] sm:$0xff]
        %v799 = vld [vmem:[#allocation12 + $0x158] sm:$0xff]
        %v800 = vld [vmem:[#allocation12 + $0x160] sm:$0xff]
        %v801 = vld [vmem:[#allocation12 + $0x168] sm:$0xff]
        %v802 = vld [vmem:[#allocation12 + $0x170] sm:$0xff]
        %v803 = vld [vmem:[#allocation12 + $0x178] sm:$0xff]
        %v805 = vlaneseq
        %v806 = vshrl.u32 %v805, 7
        %v807 = vsub.s32 0, %v806
        %v808 = vrot.slane %v466, %v807
        %v809 = vlaneseq
        %v810 = vshrl.u32 %v809, 7
        %v811 = vsub.s32 1, %v810
        %v812 = vrot.slane %v466, %v811
        %v813 = vlaneseq
        %v814 = vshrl.u32 %v813, 7
        %v815 = vsub.s32 2, %v814
        %v816 = vrot.slane %v466, %v815
        %820 = vmatprep.subr.mxu0 %v802
        %821 = vmatpush1.msra.mxu0 %v801
        %822 = vmatprep.subr.mxu0 %v799
        %823 = vmatpush1.msra.mxu0 %v798
        %824 = vmatprep.subr.mxu0 %v796
        %825 = vmatpush1.msra.mxu0 %v795
        %826 = vmatprep.subr.mxu0 %v793
        %827 = vmatpush1.msra.mxu0 %v792
        %828 = vmatprep.subr.mxu0 %v790
        %829 = vmatpush1.msra.mxu0 %v789
        %830 = vmatprep.subr.mxu0 %v787
        %831 = vmatpush1.msra.mxu0 %v786
        %832 = vmatprep.subr.mxu0 %v784
        %833 = vmatpush1.msra.mxu0 %v783
        %834 = vmatprep.subr.mxu0 %v781
        %835 = vmatpush1.msra.mxu0 %v780
        %836 = vmatprep.subr.mxu0 %v778
        %837 = vmatpush1.msra.mxu0 %v777
        %838 = vmatprep.subr.mxu0 %v775
        %839 = vmatpush1.msra.mxu0 %v774
        %840 = vmatprep.subr.mxu0 %v772
        %841 = vmatpush1.msra.mxu0 %v771
        %842 = vmatprep.subr.mxu0 %v769
        %843 = vmatpush1.msra.mxu0 %v768
        %844 = vmatprep.subr.mxu0 %v766
        %845 = vmatpush1.msra.mxu0 %v765
        %846 = vmatprep.subr.mxu0 %v763
        %847 = vmatpush1.msra.mxu0 %v762
        %848 = vmatprep.subr.mxu0 %v760
        %849 = vmatpush1.msra.mxu0 %v759
        %850 = vmatprep.subr.mxu0 %v757
        %851 = vmatpush1.msra.mxu0 %v756
        %852 = vmatprep.subr.mxu0 0.0
        %853 = vmatpush2.msra.mxu0 0.0
        %854 = vmatprep.subr.mxu0 0.0
        %855 = vmatpush2.msra.mxu0 0.0
        %856 = vmatprep.subr.mxu0 0.0
        %857 = vmatpush2.msra.mxu0 0.0
        %858 = vmatprep.subr.mxu0 0.0
        %859 = vmatpush2.msra.mxu0 0.0
        %860 = vmatprep.subr.mxu0 0.0
        %861 = vmatpush2.msra.mxu0 0.0
        %862 = vmatprep.subr.mxu0 0.0
        %863 = vmatpush2.msra.mxu0 0.0
        %864 = vmatprep.subr.mxu0 0.0
        %865 = vmatpush2.msra.mxu0 0.0
        %866 = vmatprep.subr.mxu0 0.0
        %867 = vmatpush2.msra.mxu0 0.0
        %868 = vmatprep.subr.mxu0 0.0
        %869 = vmatpush2.msra.mxu0 0.0
        %870 = vmatprep.subr.mxu0 0.0
        %871 = vmatpush2.msra.mxu0 0.0
        %872 = vmatprep.subr.mxu0 0.0
        %873 = vmatpush2.msra.mxu0 0.0
        %874 = vmatprep.subr.mxu0 0.0
        %875 = vmatpush2.msra.mxu0 0.0
        %876 = vmatprep.subr.mxu0 0.0
        %877 = vmatpush2.msra.mxu0 0.0
        %878 = vmatprep.subr.mxu0 0.0
        %879 = vmatpush2.msra.mxu0 0.0
        %880 = vmatprep.subr.mxu0 0.0
        %881 = vmatpush2.msra.mxu0 0.0
        %882 = vmatprep.subr.mxu0 0.0
        %883 = vmatpush2.msra.mxu0 0.0
        %884 = vmatprep.mubr.f32.mxu0 0.0
        %885 = vmatmul.mubr.f32.gmra.mxu0 %v461
        %v886 = vpop.f32.mrf.mxu0
        %v887 = vadd.f32 %v808, %v886
        %v888 = vpop.f32.mrf.mxu0
        %v889 = vadd.f32 %v812, %v888
        %890 = vdwg.mxu0
        %891 = vmatprep.subr.mxu0 0.0
        %892 = vmatpush1.msra.mxu0 %v803
        %893 = vmatprep.subr.mxu0 0.0
        %894 = vmatpush1.msra.mxu0 %v800
        %895 = vmatprep.subr.mxu0 0.0
        %896 = vmatpush1.msra.mxu0 %v797
        %897 = vmatprep.subr.mxu0 0.0
        %898 = vmatpush1.msra.mxu0 %v794
        %899 = vmatprep.subr.mxu0 0.0
        %900 = vmatpush1.msra.mxu0 %v791
        %901 = vmatprep.subr.mxu0 0.0
        %902 = vmatpush1.msra.mxu0 %v788
        %903 = vmatprep.subr.mxu0 0.0
        %904 = vmatpush1.msra.mxu0 %v785
        %905 = vmatprep.subr.mxu0 0.0
        %906 = vmatpush1.msra.mxu0 %v782
        %907 = vmatprep.subr.mxu0 0.0
        %908 = vmatpush1.msra.mxu0 %v779
        %909 = vmatprep.subr.mxu0 0.0
        %910 = vmatpush1.msra.mxu0 %v776
        %911 = vmatprep.subr.mxu0 0.0
        %912 = vmatpush1.msra.mxu0 %v773
        %913 = vmatprep.subr.mxu0 0.0
        %914 = vmatpush1.msra.mxu0 %v770
        %915 = vmatprep.subr.mxu0 0.0
        %916 = vmatpush1.msra.mxu0 %v767
        %917 = vmatprep.subr.mxu0 0.0
        %918 = vmatpush1.msra.mxu0 %v764
        %919 = vmatprep.subr.mxu0 0.0
        %920 = vmatpush1.msra.mxu0 %v761
        %921 = vmatprep.subr.mxu0 0.0
        %922 = vmatpush1.msra.mxu0 %v758
        %923 = vmatprep.subr.mxu0 0.0
        %924 = vmatpush2.msra.mxu0 0.0
        %925 = vmatprep.subr.mxu0 0.0
        %926 = vmatpush2.msra.mxu0 0.0
        %927 = vmatprep.subr.mxu0 0.0
        %928 = vmatpush2.msra.mxu0 0.0
        %929 = vmatprep.subr.mxu0 0.0
        %930 = vmatpush2.msra.mxu0 0.0
        %931 = vmatprep.subr.mxu0 0.0
        %932 = vmatpush2.msra.mxu0 0.0
        %933 = vmatprep.subr.mxu0 0.0
        %934 = vmatpush2.msra.mxu0 0.0
        %935 = vmatprep.subr.mxu0 0.0
        %936 = vmatpush2.msra.mxu0 0.0
        %937 = vmatprep.subr.mxu0 0.0
        %938 = vmatpush2.msra.mxu0 0.0
        %939 = vmatprep.subr.mxu0 0.0
        %940 = vmatpush2.msra.mxu0 0.0
        %941 = vmatprep.subr.mxu0 0.0
        %942 = vmatpush2.msra.mxu0 0.0
        %943 = vmatprep.subr.mxu0 0.0
        %944 = vmatpush2.msra.mxu0 0.0
        %945 = vmatprep.subr.mxu0 0.0
        %946 = vmatpush2.msra.mxu0 0.0
        %947 = vmatprep.subr.mxu0 0.0
        %948 = vmatpush2.msra.mxu0 0.0
        %949 = vmatprep.subr.mxu0 0.0
        %950 = vmatpush2.msra.mxu0 0.0
        %951 = vmatprep.subr.mxu0 0.0
        %952 = vmatpush2.msra.mxu0 0.0
        %953 = vmatprep.subr.mxu0 0.0
        %954 = vmatpush2.msra.mxu0 0.0
        %955 = vmatprep.mubr.f32.mxu0 0.0
        %956 = vmatmul.mubr.f32.gmra.mxu0 %v461
        %v957 = vpop.f32.mrf.mxu0
        %v958 = vadd.f32 %v816, %v957
        %v959 = vpop.f32.mrf.mxu0
        %960 = vdwg.mxu0
        %v961 = vadd.f32 %v682, %v887
        %v962 = vxor.u32 %v961, 2147483648
        %v963 = vmul.f32 %v962, 1.442695
        %v964 = vpow.pop %v963
        %v965 = vadd.f32 %v964, 1.0
        %v966 = vrcp.pop %v965
        %v967 = vmul.f32 1.0, %v966
        %v968 = vadd.f32 %v684, %v889
        %v969 = vxor.u32 %v968, 2147483648
        %v970 = vmul.f32 %v969, 1.442695
        %v971 = vpow.pop %v970
        %v972 = vadd.f32 %v971, 1.0
        %v973 = vrcp.pop %v972
        %v974 = vmul.f32 1.0, %v973
        %v975 = vmul.f32 %v967, %v958
        %v976 = vadd.f32 %v753, %v975
        %v977 = vtanh.pop %v976
        %v978 = vsub.f32 1.0, %v974
        %v979 = vmul.f32 %v978, %v977
        %v980 = vmul.f32 %v974, %v461
        %v981 = vadd.f32 %v979, %v980
        %982 = vst [vmem:[#allocation2] sm:$0xff] %v981
        %983 = vst [vmem:[#allocation16] sm:$0xff] %v981
        %v984 = vld [vmem:[#allocation14] sm:$0xff]
        %v985 = vld [vmem:[#allocation14 + $0x8] sm:$0xff]
        %v986 = vld [vmem:[#allocation14 + $0x10] sm:$0xff]
        %v987 = vld [vmem:[#allocation14 + $0x18] sm:$0xff]
        %v988 = vld [vmem:[#allocation14 + $0x20] sm:$0xff]
        %v989 = vld [vmem:[#allocation14 + $0x28] sm:$0xff]
        %v990 = vld [vmem:[#allocation14 + $0x30] sm:$0xff]
        %v991 = vld [vmem:[#allocation14 + $0x38] sm:$0xff]
        %v992 = vld [vmem:[#allocation14 + $0x40] sm:$0xff]
        %v993 = vld [vmem:[#allocation14 + $0x48] sm:$0xff]
        %v994 = vld [vmem:[#allocation14 + $0x50] sm:$0xff]
        %v995 = vld [vmem:[#allocation14 + $0x58] sm:$0xff]
        %v996 = vld [vmem:[#allocation14 + $0x60] sm:$0xff]
        %v997 = vld [vmem:[#allocation14 + $0x68] sm:$0xff]
        %v998 = vld [vmem:[#allocation14 + $0x70] sm:$0xff]
        %v999 = vld [vmem:[#allocation14 + $0x78] sm:$0xff]
        %v1000 = vlaneseq
        %v1001 = vshrl.u32 %v1000, 7
        %v1002 = vsub.s32 0, %v1001
        %v1003 = vrot.slane %v467, %v1002
        %1004 = vmatprep.subr.mxu0 0.0
        %1005 = vmatpush1.msra.mxu0 %v999
        %1006 = vmatprep.subr.mxu0 0.0
        %1007 = vmatpush1.msra.mxu0 %v998
        %1008 = vmatprep.subr.mxu0 0.0
        %1009 = vmatpush1.msra.mxu0 %v997
        %1010 = vmatprep.subr.mxu0 0.0
        %1011 = vmatpush1.msra.mxu0 %v996
        %1012 = vmatprep.subr.mxu0 0.0
        %1013 = vmatpush1.msra.mxu0 %v995
        %1014 = vmatprep.subr.mxu0 0.0
        %1015 = vmatpush1.msra.mxu0 %v994
        %1016 = vmatprep.subr.mxu0 0.0
        %1017 = vmatpush1.msra.mxu0 %v993
        %1018 = vmatprep.subr.mxu0 0.0
        %1019 = vmatpush1.msra.mxu0 %v992
        %1020 = vmatprep.subr.mxu0 0.0
        %1021 = vmatpush1.msra.mxu0 %v991
        %1022 = vmatprep.subr.mxu0 0.0
        %1023 = vmatpush1.msra.mxu0 %v990
        %1024 = vmatprep.subr.mxu0 0.0
        %1025 = vmatpush1.msra.mxu0 %v989
        %1026 = vmatprep.subr.mxu0 0.0
        %1027 = vmatpush1.msra.mxu0 %v988
        %1028 = vmatprep.subr.mxu0 0.0
        %1029 = vmatpush1.msra.mxu0 %v987
        %1030 = vmatprep.subr.mxu0 0.0
        %1031 = vmatpush1.msra.mxu0 %v986
        %1032 = vmatprep.subr.mxu0 0.0
        %1033 = vmatpush1.msra.mxu0 %v985
        %1034 = vmatprep.subr.mxu0 0.0
        %1035 = vmatpush1.msra.mxu0 %v984
        %1036 = vmatprep.subr.mxu0 0.0
        %1037 = vmatpush2.msra.mxu0 0.0
        %1038 = vmatprep.subr.mxu0 0.0
        %1039 = vmatpush2.msra.mxu0 0.0
        %1040 = vmatprep.subr.mxu0 0.0
        %1041 = vmatpush2.msra.mxu0 0.0
        %1042 = vmatprep.subr.mxu0 0.0
        %1043 = vmatpush2.msra.mxu0 0.0
        %1044 = vmatprep.subr.mxu0 0.0
        %1045 = vmatpush2.msra.mxu0 0.0
        %1046 = vmatprep.subr.mxu0 0.0
        %1047 = vmatpush2.msra.mxu0 0.0
        %1048 = vmatprep.subr.mxu0 0.0
        %1049 = vmatpush2.msra.mxu0 0.0
        %1050 = vmatprep.subr.mxu0 0.0
        %1051 = vmatpush2.msra.mxu0 0.0
        %1052 = vmatprep.subr.mxu0 0.0
        %1053 = vmatpush2.msra.mxu0 0.0
        %1054 = vmatprep.subr.mxu0 0.0
        %1055 = vmatpush2.msra.mxu0 0.0
        %1056 = vmatprep.subr.mxu0 0.0
        %1057 = vmatpush2.msra.mxu0 0.0
        %1058 = vmatprep.subr.mxu0 0.0
        %1059 = vmatpush2.msra.mxu0 0.0
        %1060 = vmatprep.subr.mxu0 0.0
        %1061 = vmatpush2.msra.mxu0 0.0
        %1062 = vmatprep.subr.mxu0 0.0
        %1063 = vmatpush2.msra.mxu0 0.0
        %1064 = vmatprep.subr.mxu0 0.0
        %1065 = vmatpush2.msra.mxu0 0.0
        %1066 = vmatprep.subr.mxu0 0.0
        %1067 = vmatpush2.msra.mxu0 0.0
        %1068 = vmatprep.mubr.f32.mxu0 0.0
        %1069 = vmatmul.mubr.f32.gmra.mxu0 %v981
        %v1070 = vpop.f32.mrf.mxu0
        %v1071 = vadd.f32 %v1003, %v1070
        %v1072 = vpop.f32.mrf.mxu0
        %1073 = vdwg.mxu0
        %v1074 = vld [vmem:[%s394] sm:$0xff]
        %vm1075 = vcmp.gt.f32.partialorder %v1074, 0.5
        %v1076 = vsel %vm1075, %v1071, -1e+10
        %1077 = vmax.xlane.f32.xlu0 %v1076
        %v1078 = vpop.xlane.xlu0 %1077
        %v1079 = vsub.f32 %v1076, %v1078
        %v1080 = vmul.f32 %v1079, 1.442695
        %v1081 = vpow.pop %v1080
        %1082 = vadd.xlane.f32.xlu0 %v1081
        %v1083 = vpop.xlane.xlu0 %1082
        %v1084 = vrcp.pop %v1083
        %v1085 = vmul.f32 %v1081, %v1084
        %1086 = vst [vmem:[%s451] sm:$0xff] %v1085
        %s1087 = sand.u32 %s219, 1
        %s1088 = scalar_lea.sflag [#allocation5], %s1087
        %s1089 = sand.u32 %s219, 1
        %s1090 = smul.addr %s1089, 8
        %s1091 = scalar_lea.vmem [#allocation15], %s1090
        // Predicated region
        $region85: #{tpu_custom_call.1} parent=51 // pred_check
          %p1092 = pneg %p229
        $region86: #{tpu_custom_call.1} parent=51 // pred_check_branch
          %1094 = sbr.rel (%p1092) target = $region88
        $region87: #{tpu_custom_call.1} parent=51 // pred_region
          %s1096 = ssub.s32 128, 128
          %1097 = vsyncadd %s1088, %s1096
          %s1098 = smul.addr %s33, 128
          %s1099 = scalar_lea.hbm %s8, %s1098
          %s1101 = sshll.u32 %s1091, 4
          %s1102 = int_to_ptr.vmem [resolvable:$true] %s1101
          %1104 = dma.vmem_to_hbm [thread:$0]  %s1102, 128, %s1099, %s1088
        $region88: #{tpu_custom_call.1} parent=51 // pred_fallthru
          _
        // Predicated region
        $region89: #{tpu_custom_call.1} parent=51 // pred_check
          %p1105 = pneg %p250
        $region90: #{tpu_custom_call.1} parent=51 // pred_check_branch
          %1107 = sbr.rel (%p1105) target = $region92
        $region91: #{tpu_custom_call.1} parent=51 // pred_region
          %s1109 = ssub.s32 128, 128
          %1110 = vsyncadd [#allocation17], %s1109
          %s1112 = sshll.u32 [#allocation16], 4
          %s1113 = int_to_ptr.vmem [resolvable:$true] %s1112
          %1115 = dma.vmem_to_hbm [thread:$0]  %s1113, 128, %s9, [#allocation17]
        $region92: #{tpu_custom_call.1} parent=51 // pred_fallthru
          _
        // Predicated region
        $region93: #{tpu_custom_call.1} parent=51 // pred_check
          %p1116 = pneg %p250
        $region94: #{tpu_custom_call.1} parent=51 // pred_check_branch
          %1118 = sbr.rel (%p1116) target = $region96
        $region95: #{tpu_custom_call.1} parent=51 // pred_region
          %1119 = dma.done [#allocation17], 128
        $region96: #{tpu_custom_call.1} parent=51 // pred_fallthru
          _
      $region52: #{tpu_custom_call.1} parent=5 // pred_fallthru
        _
      %p1120 = scmp.le.s32.totalorder 2, %s28
      // Predicated region
      $region97: #{tpu_custom_call.1} parent=5 // pred_check
        %p1121 = pneg %p1120
      $region98: #{tpu_custom_call.1} parent=5 // pred_check_branch
        %1123 = sbr.rel (%p1121) target = $region100
      $region99: #{tpu_custom_call.1} parent=5 // pred_region
        %s1124 = ssub.s32 %s28, 2
        // Predicated region
        $region101: #{tpu_custom_call.1} parent=99 // pred_check
          %p1125 = pneg %p235
        $region102: #{tpu_custom_call.1} parent=99 // pred_check_branch
          %1127 = sbr.rel (%p1125) target = $region104
        $region103: #{tpu_custom_call.1} parent=99 // pred_region
          %s1128 = sand.u32 %s220, 1
          %s1129 = scalar_lea.sflag [#allocation5], %s1128
          %s1130 = sand.u32 %s220, 1
          %s1131 = smul.addr %s1130, 8
          %s1132 = scalar_lea.vmem [#allocation15], %s1131
          %1133 = dma.done %s1129, 128
        $region104: #{tpu_custom_call.1} parent=99 // pred_fallthru
          _
      $region100: #{tpu_custom_call.1} parent=5 // pred_fallthru
        _
    $region6: #{tpu_custom_call.1} parent=1 // loop_footer
      %s32 = sadd.s32 1, %s28
    $region7: #{tpu_custom_call.1} parent=1 // loop_footer_branch
      %27 = sbr.rel target = $region3
    $region8: #{tpu_custom_call.1} parent=1 // loop_exit
      _
    %1134 = vsyncpa [#allocation4], 1
    %s1135 = scalar_lea.sflag [#allocation4], 1
    %1136 = vsyncpa %s1135, 1
    %1137 = vsyncpa [#allocation7], 1
    %s1138 = scalar_lea.sflag [#allocation7], 1
    %1139 = vsyncpa %s1138, 1
    %1140 = vsyncpa [#allocation10], 1
    %1141 = vsyncpa [#allocation13], 1
    %1142 = vsyncpa [#allocation5], 1
    %s1143 = scalar_lea.sflag [#allocation5], 1
    %1144 = vsyncpa %s1143, 1
    %1145 = vsyncpa [#allocation17], 1

</llo_original>
